<compile_context>
chip_gen: v7x
topology: tpu7x:2x2x1
jax: 0.10.0
libtpu: 0.0.40
codegen_flags: <defaults>
</compile_context>

<pallas_src>
import functools
import math

import jax
import jax.numpy as jnp
from jax import lax
from jax.experimental import pallas as pl
from jax.experimental.pallas import tpu as pltpu


# ----------------------------------------------------------------------------
# Pallas kernel: one DiTOdeNet vector-field evaluation for one (batch element,
# query-token tile).  adaLN modulation vectors are precomputed outside.
# ----------------------------------------------------------------------------
def _dit_ode_vf_kernel(xq_ref, xf_ref, mod_ref,
                       wq_ref, bq_ref, wk_ref, bk_ref, wv_ref, bv_ref,
                       wproj_ref, bproj_ref,
                       wfc1_ref, bfc1_ref, wfc2_ref, bfc2_ref,
                       out_ref, *, num_heads):
    f32 = jnp.float32
    bf16 = jnp.bfloat16

    TQ, D = xq_ref.shape          # query-token tile
    N = xf_ref.shape[0]           # full sequence (for K/V)
    H = num_heads
    Dh = D // H
    scale = Dh ** -0.5
    eps = 1e-6

    x_q = xq_ref[...]             # (TQ, D) f32
    x_f = xf_ref[...]             # (N, D)  f32
    mods = mod_ref[...]           # (6, D)  f32  (precomputed adaLN outputs)
    shift_msa = mods[0:1, :]
    scale_msa = mods[1:2, :]
    gate_msa = mods[2:3, :]
    shift_mlp = mods[3:4, :]
    scale_mlp = mods[4:5, :]
    gate_mlp = mods[5:6, :]

    def layernorm(z):  # elementwise_affine=False, eps=1e-6, biased variance
        mu = jnp.mean(z, axis=-1, keepdims=True)
        mu2 = jnp.mean(z * z, axis=-1, keepdims=True)
        var = mu2 - mu * mu
        return (z - mu) * lax.rsqrt(var + eps)

    # --- branch 1: attention ------------------------------------------------
    mod1_q = layernorm(x_q) * (1.0 + scale_msa) + shift_msa     # (TQ, D)
    mod1_f = layernorm(x_f) * (1.0 + scale_msa) + shift_msa     # (N, D)

    q = jnp.dot(mod1_q.astype(bf16), wq_ref[...],
                preferred_element_type=f32) + bq_ref[...]       # (TQ, D)
    k = jnp.dot(mod1_f.astype(bf16), wk_ref[...],
                preferred_element_type=f32) + bk_ref[...]       # (N, D)
    v = jnp.dot(mod1_f.astype(bf16), wv_ref[...],
                preferred_element_type=f32) + bv_ref[...]       # (N, D)

    # head-major (H, tokens, Dh) tensors; QK^T / PV as single batched einsums
    qh = jnp.stack([q[:, h * Dh:(h + 1) * Dh] for h in range(H)], axis=0)
    kh = jnp.stack([k[:, h * Dh:(h + 1) * Dh] for h in range(H)], axis=0)
    vh = jnp.stack([v[:, h * Dh:(h + 1) * Dh] for h in range(H)], axis=0)

    s = jnp.einsum('hqd,hkd->hqk', qh.astype(bf16), kh.astype(bf16),
                   preferred_element_type=f32) * scale          # (H, TQ, N)
    m = jnp.max(s, axis=-1, keepdims=True)
    p = jnp.exp(s - m)
    row_sum = jnp.sum(p, axis=-1, keepdims=True)                # (H, TQ, 1)
    o = jnp.einsum('hqk,hkd->hqd', p.astype(bf16), vh.astype(bf16),
                   preferred_element_type=f32)                  # (H, TQ, Dh)
    o = o * pl.reciprocal(row_sum, approx=True)                 # flash-style norm
    attn_cat = jnp.concatenate([o[h] for h in range(H)], axis=-1)   # (TQ, D)

    attn_out = jnp.dot(attn_cat.astype(bf16), wproj_ref[...],
                       preferred_element_type=f32) + bproj_ref[...]
    x1 = x_q + gate_msa * attn_out

    # --- branch 2: MLP (GELU tanh approximation) -----------------------------
    mod2 = layernorm(x1) * (1.0 + scale_mlp) + shift_mlp
    ff = jnp.dot(mod2.astype(bf16), wfc1_ref[...],
                 preferred_element_type=f32) + bfc1_ref[...]    # (TQ, Hm)
    cst = math.sqrt(2.0 / math.pi)
    ff = 0.5 * ff * (1.0 + jnp.tanh(cst * (ff + 0.044715 * ff * ff * ff)))
    ff2 = jnp.dot(ff.astype(bf16), wfc2_ref[...],
                  preferred_element_type=f32) + bfc2_ref[...]   # (TQ, D)

    out_ref[...] = (x1 + gate_mlp * ff2).astype(out_ref.dtype)


def _choose_tq(n):
    for cand in (256, 128):
        if n % cand == 0:
            return cand
    return n


def dit_ode_vector_field(x, mods, w, *, num_heads):
    """dx/dt for the DiT ODE block. x:(B,N,D) f32, mods:(B,6,D) f32, w: bf16/f32."""
    B, N, D = x.shape
    H = num_heads
    Hm = w["wfc1"].shape[1]
    TQ = _choose_tq(N)
    NT = N // TQ

    weights = (w["wq"], w["bq"], w["wk"], w["bk"], w["wv"], w["bv"],
               w["wproj"], w["bproj"], w["wfc1"], w["bfc1"], w["wfc2"], w["bfc2"])

    def const_spec(arr):  # grid-invariant full-array block (stays resident)
        shape = arr.shape
        return pl.BlockSpec(shape, lambda b, qi, _s=shape: (0,) * len(_s))

    in_specs = [
        pl.BlockSpec((None, TQ, D), lambda b, qi: (b, qi, 0)),   # x query tile
        pl.BlockSpec((None, N, D), lambda b, qi: (b, 0, 0)),     # x full seq (K/V)
        pl.BlockSpec((None, 6, D), lambda b, qi: (b, 0, 0)),     # adaLN vectors
    ] + [const_spec(a) for a in weights]
    out_specs = pl.BlockSpec((None, TQ, D), lambda b, qi: (b, qi, 0))

    # Advisory cost estimate (per vector-field evaluation).
    flops = int(2 * B * (N * D * D                    # Q proj
                         + NT * 2 * N * D * D         # K,V proj (per q-tile)
                         + 2 * N * N * D              # QK^T + PV
                         + N * D * D                  # output proj
                         + 2 * N * D * Hm))           # fc1 + fc2
    transcendentals = int(B * (H * N * N + N * Hm + 8 * N))
    weight_bytes = sum(int(a.size) * a.dtype.itemsize for a in weights)
    bytes_accessed = int(weight_bytes
                         + 4 * (2 * B * N * D + B * NT * N * D + B * 6 * D))

    # Explicit VMEM budget: bf16 weights (double-buffer worst case) +
    # activation tiles, capped at v7x's 64 MiB.
    act_vmem = 4 * 4 * (TQ * D + N * D + 6 * D + TQ * Hm + H * TQ * N + 3 * N * D)
    vmem_limit = int(min(64 * 1024 * 1024,
                         max(32 * 1024 * 1024,
                             2 * weight_bytes + act_vmem + (1 << 22))))

    kernel = functools.partial(_dit_ode_vf_kernel, num_heads=num_heads)
    return pl.pallas_call(
        kernel,
        out_shape=jax.ShapeDtypeStruct((B, N, D), jnp.float32),
        grid=(B, NT),
        in_specs=in_specs,
        out_specs=out_specs,
        compiler_params=pltpu.CompilerParams(
            dimension_semantics=("parallel", "parallel"),
            vmem_limit_bytes=vmem_limit),
        cost_estimate=pl.CostEstimate(flops=flops,
                                      transcendentals=transcendentals,
                                      bytes_accessed=bytes_accessed),
    )(x, x, mods, *weights)


# ----------------------------------------------------------------------------
# dopri5 adaptive integrator (plain-JAX glue around the Pallas vector field),
# with FSAL reuse (k7 of an accepted step becomes k1 of the next).
# ----------------------------------------------------------------------------
# TODO(synk): torchdiffeq's odeint_adjoint step-size heuristics (initial step
# selection / PI controller / mixed error norm) are not byte-identical; this
# is a standard FSAL dopri5 with the same tableau and rtol=atol=1e-5.
def odeint_dopri5(f, y0, t0=0.0, t1=1.0, rtol=1e-5, atol=1e-5, h0=0.1):
    B5 = (35.0 / 384.0, 0.0, 500.0 / 1113.0, 125.0 / 192.0,
          -2187.0 / 6784.0, 11.0 / 84.0, 0.0)
    B4 = (5179.0 / 57600.0, 0.0, 7571.0 / 16695.0, 393.0 / 640.0,
          -92097.0 / 339200.0, 187.0 / 2100.0, 1.0 / 40.0)

    def stages(y, h, k1):
        k2 = f(y + h * (1.0 / 5.0) * k1)
        k3 = f(y + h * (3.0 / 40.0 * k1 + 9.0 / 40.0 * k2))
        k4 = f(y + h * (44.0 / 45.0 * k1 - 56.0 / 15.0 * k2 + 32.0 / 9.0 * k3))
        k5 = f(y + h * (19372.0 / 6561.0 * k1 - 25360.0 / 2187.0 * k2
                        + 64448.0 / 6561.0 * k3 - 212.0 / 729.0 * k4))
        k6 = f(y + h * (9017.0 / 3168.0 * k1 - 355.0 / 33.0 * k2
                        + 46732.0 / 5247.0 * k3 + 49.0 / 176.0 * k4
                        - 5103.0 / 18656.0 * k5))
        y5 = y + h * (B5[0] * k1 + B5[2] * k3 + B5[3] * k4
                      + B5[4] * k5 + B5[5] * k6)
        k7 = f(y5)                      # FSAL: reused as k1 if step accepted
        ks = (k1, k2, k3, k4, k5, k6, k7)
        err = h * sum((b5 - b4) * k for b5, b4, k in zip(B5, B4, ks))
        return y5, err, k7

    def err_norm(err, y_old, y_new):
        sc = atol + rtol * jnp.maximum(jnp.abs(y_old), jnp.abs(y_new))
        return jnp.sqrt(jnp.mean((err / sc) ** 2))

    t_end = jnp.float32(t1)

    def cond(state):
        t, _, _, _, n = state
        return jnp.logical_and(t < t_end - 1e-6, n < 1000)

    def body(state):
        t, y, h, k1, n = state
        h = jnp.minimum(h, t_end - t)
        y_new, err, k7 = stages(y, h, k1)
        en = err_norm(err, y, y_new)
        accept = en <= 1.0
        t_out = jnp.where(accept, t + h, t)
        y_out = jnp.where(accept, y_new, y)
        k1_out = jnp.where(accept, k7, k1)   # rejected: y unchanged -> keep k1
        factor = jnp.where(en > 0.0,
                           jnp.clip(0.9 * en ** (-0.2), 0.2, 10.0),
                           jnp.float32(10.0))
        return t_out, y_out, h * factor, k1_out, n + 1

    init = (jnp.float32(t0), y0, jnp.float32(h0), f(y0), jnp.int32(0))
    _, y_final, _, _, _ = lax.while_loop(cond, body, init)
    return y_final


# ----------------------------------------------------------------------------
# DiTOdeBlock.forward: solve x' = DiTOdeNet(x, c) from t=0 to t=1, return x(1)
# ----------------------------------------------------------------------------
def dit_ode_block_forward(x, c, params, *, hidden_size, num_heads):
    D = hidden_size
    bf16 = jnp.bfloat16

    # adaLN branch hoisted out of the ODE loop entirely (dc/dt = 0).
    silu_c = c * jax.nn.sigmoid(c)
    ada = jnp.dot(silu_c, params["wada"]) + params["bada"]        # (B, 6D)
    mods = ada.reshape(c.shape[0], 6, D).astype(jnp.float32)      # chunk order ==
    # [shift_msa, scale_msa, gate_msa, shift_mlp, scale_mlp, gate_mlp]

    wqkv, bqkv = params["wqkv"], params["bqkv"]
    w = {
        "wq": wqkv[:, 0 * D:1 * D].astype(bf16),
        "wk": wqkv[:, 1 * D:2 * D].astype(bf16),
        "wv": wqkv[:, 2 * D:3 * D].astype(bf16),
        "bq": bqkv[:, 0 * D:1 * D],
        "bk": bqkv[:, 1 * D:2 * D],
        "bv": bqkv[:, 2 * D:3 * D],
        "wproj": params["wproj"].astype(bf16),
        "bproj": params["bproj"],
        "wfc1": params["wfc1"].astype(bf16),
        "bfc1": params["bfc1"],
        "wfc2": params["wfc2"].astype(bf16),
        "bfc2": params["bfc2"],
    }

    f = lambda y: dit_ode_vector_field(y, mods, w, num_heads=num_heads)
    return odeint_dopri5(f, x)


def init_params(key, hidden_size, num_heads, mlp_ratio=4.0):
    D = hidden_size
    Hm = int(D * mlp_ratio)
    ks = jax.random.split(key, 6)
    std = 0.02
    return {
        # stored pre-transposed so the kernel does row-major (in, out) matmuls
        "wada": jax.random.normal(ks[0], (D, 6 * D), jnp.float32) * std,
        "bada": jnp.zeros((1, 6 * D), jnp.float32),
        "wqkv": jax.random.normal(ks[1], (D, 3 * D), jnp.float32) * std,
        "bqkv": jnp.zeros((1, 3 * D), jnp.float32),
        "wproj": jax.random.normal(ks[2], (D, D), jnp.float32) * std,
        "bproj": jnp.zeros((1, D), jnp.float32),
        "wfc1": jax.random.normal(ks[3], (D, Hm), jnp.float32) * std,
        "bfc1": jnp.zeros((1, Hm), jnp.float32),
        "wfc2": jax.random.normal(ks[4], (Hm, D), jnp.float32) * std,
        "bfc2": jnp.zeros((1, D), jnp.float32),
    }


if __name__ == "__main__":
    B, N, D, H = 2, 8, 32, 4       # batch, tokens, hidden_size, num_heads

    key = jax.random.PRNGKey(0)
    kx, kc, kp = jax.random.split(key, 3)
    x = jax.random.normal(kx, (B, N, D), jnp.float32)
    c = jax.random.normal(kc, (B, D), jnp.float32)
    params = init_params(kp, D, H, mlp_ratio=4.0)

    fwd = jax.jit(functools.partial(dit_ode_block_forward,
                                    hidden_size=D, num_heads=H))
    out = fwd(x, c, params)
    jax.block_until_ready(out)
    assert out.shape == (B, N, D)
    print("KERNEL_OK")
</pallas_src>

<mosaic_0001>
module attributes {stable_mosaic.version = 11 : i64} {
  func.func @_dit_ode_vf_kernel(%arg0: i32, %arg1: i32, %arg2: memref<1x8x32xf32, #tpu.memory_space<vmem>>, %arg3: memref<1x8x32xf32, #tpu.memory_space<vmem>>, %arg4: memref<1x6x32xf32, #tpu.memory_space<vmem>>, %arg5: memref<32x32xbf16, #tpu.memory_space<vmem>>, %arg6: memref<1x32xf32, #tpu.memory_space<vmem>>, %arg7: memref<32x32xbf16, #tpu.memory_space<vmem>>, %arg8: memref<1x32xf32, #tpu.memory_space<vmem>>, %arg9: memref<32x32xbf16, #tpu.memory_space<vmem>>, %arg10: memref<1x32xf32, #tpu.memory_space<vmem>>, %arg11: memref<32x32xbf16, #tpu.memory_space<vmem>>, %arg12: memref<1x32xf32, #tpu.memory_space<vmem>>, %arg13: memref<32x128xbf16, #tpu.memory_space<vmem>>, %arg14: memref<1x128xf32, #tpu.memory_space<vmem>>, %arg15: memref<128x32xbf16, #tpu.memory_space<vmem>>, %arg16: memref<1x32xf32, #tpu.memory_space<vmem>>, %arg17: memref<1x8x32xf32, #tpu.memory_space<vmem>>) attributes {dimension_semantics = [#tpu.dimension_semantics<parallel>, #tpu.dimension_semantics<parallel>], iteration_bounds = array<i64: 2, 1>, scalar_prefetch = 0 : i64, scratch_operands = 0 : i64, tpu.core_type = #tpu.core_type<tc>, window_params = [{transform_indices = @transform_0, window_bounds = array<i64: 1, 8, 32>}, {transform_indices = @transform_1, window_bounds = array<i64: 1, 8, 32>}, {transform_indices = @transform_2, window_bounds = array<i64: 1, 6, 32>}, {pipeline_mode = #tpu.pipeline_mode<synchronous>, transform_indices = @transform_3, window_bounds = array<i64: 32, 32>}, {pipeline_mode = #tpu.pipeline_mode<synchronous>, transform_indices = @transform_4, window_bounds = array<i64: 1, 32>}, {pipeline_mode = #tpu.pipeline_mode<synchronous>, transform_indices = @transform_5, window_bounds = array<i64: 32, 32>}, {pipeline_mode = #tpu.pipeline_mode<synchronous>, transform_indices = @transform_6, window_bounds = array<i64: 1, 32>}, {pipeline_mode = #tpu.pipeline_mode<synchronous>, transform_indices = @transform_7, window_bounds = array<i64: 32, 32>}, {pipeline_mode = #tpu.pipeline_mode<synchronous>, transform_indices = @transform_8, window_bounds = array<i64: 1, 32>}, {pipeline_mode = #tpu.pipeline_mode<synchronous>, transform_indices = @transform_9, window_bounds = array<i64: 32, 32>}, {pipeline_mode = #tpu.pipeline_mode<synchronous>, transform_indices = @transform_10, window_bounds = array<i64: 1, 32>}, {pipeline_mode = #tpu.pipeline_mode<synchronous>, transform_indices = @transform_11, window_bounds = array<i64: 32, 128>}, {pipeline_mode = #tpu.pipeline_mode<synchronous>, transform_indices = @transform_12, window_bounds = array<i64: 1, 128>}, {pipeline_mode = #tpu.pipeline_mode<synchronous>, transform_indices = @transform_13, window_bounds = array<i64: 128, 32>}, {pipeline_mode = #tpu.pipeline_mode<synchronous>, transform_indices = @transform_14, window_bounds = array<i64: 1, 32>}, {transform_indices = @transform_15, window_bounds = array<i64: 1, 8, 32>}]} {
    %c0 = arith.constant 0 : index
    %c0_0 = arith.constant 0 : index
    %c0_1 = arith.constant 0 : index
    %0 = vector.load %arg2[%c0, %c0_0, %c0_1] : memref<1x8x32xf32, #tpu.memory_space<vmem>>, vector<1x8x32xf32>
    %1 = vector.shape_cast %0 : vector<1x8x32xf32> to vector<8x32xf32>
    %c0_2 = arith.constant 0 : index
    %c0_3 = arith.constant 0 : index
    %c0_4 = arith.constant 0 : index
    %2 = vector.load %arg3[%c0_2, %c0_3, %c0_4] : memref<1x8x32xf32, #tpu.memory_space<vmem>>, vector<1x8x32xf32>
    %3 = vector.shape_cast %2 : vector<1x8x32xf32> to vector<8x32xf32>
    %c0_5 = arith.constant 0 : index
    %c0_6 = arith.constant 0 : index
    %c0_7 = arith.constant 0 : index
    %4 = vector.load %arg4[%c0_5, %c0_6, %c0_7] : memref<1x6x32xf32, #tpu.memory_space<vmem>>, vector<1x6x32xf32>
    %5 = vector.shape_cast %4 : vector<1x6x32xf32> to vector<6x32xf32>
    %6 = vector.extract_strided_slice %5 {offsets = [0, 0], sizes = [1, 32], strides = [1, 1]} : vector<6x32xf32> to vector<1x32xf32>
    %7 = vector.extract_strided_slice %5 {offsets = [1, 0], sizes = [1, 32], strides = [1, 1]} : vector<6x32xf32> to vector<1x32xf32>
    %8 = vector.extract_strided_slice %5 {offsets = [2, 0], sizes = [1, 32], strides = [1, 1]} : vector<6x32xf32> to vector<1x32xf32>
    %9 = vector.extract_strided_slice %5 {offsets = [3, 0], sizes = [1, 32], strides = [1, 1]} : vector<6x32xf32> to vector<1x32xf32>
    %10 = vector.extract_strided_slice %5 {offsets = [4, 0], sizes = [1, 32], strides = [1, 1]} : vector<6x32xf32> to vector<1x32xf32>
    %11 = vector.extract_strided_slice %5 {offsets = [5, 0], sizes = [1, 32], strides = [1, 1]} : vector<6x32xf32> to vector<1x32xf32>
    %cst = arith.constant dense<0.000000e+00> : vector<8xf32>
    %12 = vector.multi_reduction <add>, %1, %cst [1] : vector<8x32xf32> to vector<8xf32>
    %13 = vector.shape_cast %12 : vector<8xf32> to vector<8x1xf32>
    %cst_8 = arith.constant 3.200000e+01 : f32
    %14 = vector.broadcast %cst_8 : f32 to vector<8x1xf32>
    %15 = arith.divf %13, %14 : vector<8x1xf32>
    %16 = arith.mulf %1, %1 : vector<8x32xf32>
    %cst_9 = arith.constant dense<0.000000e+00> : vector<8xf32>
    %17 = vector.multi_reduction <add>, %16, %cst_9 [1] : vector<8x32xf32> to vector<8xf32>
    %18 = vector.shape_cast %17 : vector<8xf32> to vector<8x1xf32>
    %cst_10 = arith.constant 3.200000e+01 : f32
    %19 = vector.broadcast %cst_10 : f32 to vector<8x1xf32>
    %20 = arith.divf %18, %19 : vector<8x1xf32>
    %21 = arith.mulf %15, %15 : vector<8x1xf32>
    %22 = arith.subf %20, %21 : vector<8x1xf32>
    %23 = vector.broadcast %15 : vector<8x1xf32> to vector<8x32xf32>
    %24 = arith.subf %1, %23 : vector<8x32xf32>
    %cst_11 = arith.constant 9.99999997E-7 : f32
    %25 = vector.broadcast %cst_11 : f32 to vector<8x1xf32>
    %26 = arith.addf %22, %25 : vector<8x1xf32>
    %27 = math.rsqrt %26 : vector<8x1xf32>
    %28 = vector.broadcast %27 : vector<8x1xf32> to vector<8x32xf32>
    %29 = arith.mulf %24, %28 : vector<8x32xf32>
    %cst_12 = arith.constant 1.000000e+00 : f32
    %30 = vector.broadcast %cst_12 : f32 to vector<1x32xf32>
    %31 = arith.addf %30, %7 : vector<1x32xf32>
    %32 = vector.broadcast %31 : vector<1x32xf32> to vector<8x32xf32>
    %33 = arith.mulf %29, %32 : vector<8x32xf32>
    %34 = vector.broadcast %6 : vector<1x32xf32> to vector<8x32xf32>
    %35 = arith.addf %33, %34 : vector<8x32xf32>
    %cst_13 = arith.constant dense<0.000000e+00> : vector<8xf32>
    %36 = vector.multi_reduction <add>, %3, %cst_13 [1] : vector<8x32xf32> to vector<8xf32>
    %37 = vector.shape_cast %36 : vector<8xf32> to vector<8x1xf32>
    %cst_14 = arith.constant 3.200000e+01 : f32
    %38 = vector.broadcast %cst_14 : f32 to vector<8x1xf32>
    %39 = arith.divf %37, %38 : vector<8x1xf32>
    %40 = arith.mulf %3, %3 : vector<8x32xf32>
    %cst_15 = arith.constant dense<0.000000e+00> : vector<8xf32>
    %41 = vector.multi_reduction <add>, %40, %cst_15 [1] : vector<8x32xf32> to vector<8xf32>
    %42 = vector.shape_cast %41 : vector<8xf32> to vector<8x1xf32>
    %cst_16 = arith.constant 3.200000e+01 : f32
    %43 = vector.broadcast %cst_16 : f32 to vector<8x1xf32>
    %44 = arith.divf %42, %43 : vector<8x1xf32>
    %45 = arith.mulf %39, %39 : vector<8x1xf32>
    %46 = arith.subf %44, %45 : vector<8x1xf32>
    %47 = vector.broadcast %39 : vector<8x1xf32> to vector<8x32xf32>
    %48 = arith.subf %3, %47 : vector<8x32xf32>
    %cst_17 = arith.constant 9.99999997E-7 : f32
    %49 = vector.broadcast %cst_17 : f32 to vector<8x1xf32>
    %50 = arith.addf %46, %49 : vector<8x1xf32>
    %51 = math.rsqrt %50 : vector<8x1xf32>
    %52 = vector.broadcast %51 : vector<8x1xf32> to vector<8x32xf32>
    %53 = arith.mulf %48, %52 : vector<8x32xf32>
    %cst_18 = arith.constant 1.000000e+00 : f32
    %54 = vector.broadcast %cst_18 : f32 to vector<1x32xf32>
    %55 = arith.addf %54, %7 : vector<1x32xf32>
    %56 = vector.broadcast %55 : vector<1x32xf32> to vector<8x32xf32>
    %57 = arith.mulf %53, %56 : vector<8x32xf32>
    %58 = vector.broadcast %6 : vector<1x32xf32> to vector<8x32xf32>
    %59 = arith.addf %57, %58 : vector<8x32xf32>
    %60 = arith.truncf %35 : vector<8x32xf32> to vector<8x32xbf16>
    %c0_19 = arith.constant 0 : index
    %c0_20 = arith.constant 0 : index
    %61 = vector.load %arg5[%c0_19, %c0_20] : memref<32x32xbf16, #tpu.memory_space<vmem>>, vector<32x32xbf16>
    %cst_21 = arith.constant dense<0.000000e+00> : vector<8x32xf32>
    %62 = tpu.matmul %60, %61, %cst_21 {dimension_numbers = #tpu.dot_dimension_numbers<[1], [0], [0], [1], [0, 0, 1, 1], [], []>} : vector<8x32xbf16>, vector<32x32xbf16>, vector<8x32xf32> -> vector<8x32xf32>
    %c0_22 = arith.constant 0 : index
    %c0_23 = arith.constant 0 : index
    %63 = vector.load %arg6[%c0_22, %c0_23] : memref<1x32xf32, #tpu.memory_space<vmem>>, vector<1x32xf32>
    %64 = vector.broadcast %63 : vector<1x32xf32> to vector<8x32xf32>
    %65 = arith.addf %62, %64 : vector<8x32xf32>
    %66 = arith.truncf %59 : vector<8x32xf32> to vector<8x32xbf16>
    %c0_24 = arith.constant 0 : index
    %c0_25 = arith.constant 0 : index
    %67 = vector.load %arg7[%c0_24, %c0_25] : memref<32x32xbf16, #tpu.memory_space<vmem>>, vector<32x32xbf16>
    %cst_26 = arith.constant dense<0.000000e+00> : vector<8x32xf32>
    %68 = tpu.matmul %66, %67, %cst_26 {dimension_numbers = #tpu.dot_dimension_numbers<[1], [0], [0], [1], [0, 0, 1, 1], [], []>} : vector<8x32xbf16>, vector<32x32xbf16>, vector<8x32xf32> -> vector<8x32xf32>
    %c0_27 = arith.constant 0 : index
    %c0_28 = arith.constant 0 : index
    %69 = vector.load %arg8[%c0_27, %c0_28] : memref<1x32xf32, #tpu.memory_space<vmem>>, vector<1x32xf32>
    %70 = vector.broadcast %69 : vector<1x32xf32> to vector<8x32xf32>
    %71 = arith.addf %68, %70 : vector<8x32xf32>
    %72 = arith.truncf %59 : vector<8x32xf32> to vector<8x32xbf16>
    %c0_29 = arith.constant 0 : index
    %c0_30 = arith.constant 0 : index
    %73 = vector.load %arg9[%c0_29, %c0_30] : memref<32x32xbf16, #tpu.memory_space<vmem>>, vector<32x32xbf16>
    %cst_31 = arith.constant dense<0.000000e+00> : vector<8x32xf32>
    %74 = tpu.matmul %72, %73, %cst_31 {dimension_numbers = #tpu.dot_dimension_numbers<[1], [0], [0], [1], [0, 0, 1, 1], [], []>} : vector<8x32xbf16>, vector<32x32xbf16>, vector<8x32xf32> -> vector<8x32xf32>
    %c0_32 = arith.constant 0 : index
    %c0_33 = arith.constant 0 : index
    %75 = vector.load %arg10[%c0_32, %c0_33] : memref<1x32xf32, #tpu.memory_space<vmem>>, vector<1x32xf32>
    %76 = vector.broadcast %75 : vector<1x32xf32> to vector<8x32xf32>
    %77 = arith.addf %74, %76 : vector<8x32xf32>
    %78 = vector.extract_strided_slice %65 {offsets = [0, 0], sizes = [8, 8], strides = [1, 1]} : vector<8x32xf32> to vector<8x8xf32>
    %79 = vector.extract_strided_slice %65 {offsets = [0, 8], sizes = [8, 8], strides = [1, 1]} : vector<8x32xf32> to vector<8x8xf32>
    %80 = vector.extract_strided_slice %65 {offsets = [0, 16], sizes = [8, 8], strides = [1, 1]} : vector<8x32xf32> to vector<8x8xf32>
    %81 = vector.extract_strided_slice %65 {offsets = [0, 24], sizes = [8, 8], strides = [1, 1]} : vector<8x32xf32> to vector<8x8xf32>
    %82 = vector.shape_cast %78 : vector<8x8xf32> to vector<1x8x8xf32>
    %83 = vector.shape_cast %79 : vector<8x8xf32> to vector<1x8x8xf32>
    %84 = vector.shape_cast %80 : vector<8x8xf32> to vector<1x8x8xf32>
    %85 = vector.shape_cast %81 : vector<8x8xf32> to vector<1x8x8xf32>
    %86 = tpu.concatenate %82, %83, %84, %85 in 0 : vector<1x8x8xf32>, vector<1x8x8xf32>, vector<1x8x8xf32>, vector<1x8x8xf32> -> vector<4x8x8xf32>
    %87 = vector.extract_strided_slice %71 {offsets = [0, 0], sizes = [8, 8], strides = [1, 1]} : vector<8x32xf32> to vector<8x8xf32>
    %88 = vector.extract_strided_slice %71 {offsets = [0, 8], sizes = [8, 8], strides = [1, 1]} : vector<8x32xf32> to vector<8x8xf32>
    %89 = vector.extract_strided_slice %71 {offsets = [0, 16], sizes = [8, 8], strides = [1, 1]} : vector<8x32xf32> to vector<8x8xf32>
    %90 = vector.extract_strided_slice %71 {offsets = [0, 24], sizes = [8, 8], strides = [1, 1]} : vector<8x32xf32> to vector<8x8xf32>
    %91 = vector.shape_cast %87 : vector<8x8xf32> to vector<1x8x8xf32>
    %92 = vector.shape_cast %88 : vector<8x8xf32> to vector<1x8x8xf32>
    %93 = vector.shape_cast %89 : vector<8x8xf32> to vector<1x8x8xf32>
    %94 = vector.shape_cast %90 : vector<8x8xf32> to vector<1x8x8xf32>
    %95 = tpu.concatenate %91, %92, %93, %94 in 0 : vector<1x8x8xf32>, vector<1x8x8xf32>, vector<1x8x8xf32>, vector<1x8x8xf32> -> vector<4x8x8xf32>
    %96 = vector.extract_strided_slice %77 {offsets = [0, 0], sizes = [8, 8], strides = [1, 1]} : vector<8x32xf32> to vector<8x8xf32>
    %97 = vector.extract_strided_slice %77 {offsets = [0, 8], sizes = [8, 8], strides = [1, 1]} : vector<8x32xf32> to vector<8x8xf32>
    %98 = vector.extract_strided_slice %77 {offsets = [0, 16], sizes = [8, 8], strides = [1, 1]} : vector<8x32xf32> to vector<8x8xf32>
    %99 = vector.extract_strided_slice %77 {offsets = [0, 24], sizes = [8, 8], strides = [1, 1]} : vector<8x32xf32> to vector<8x8xf32>
    %100 = vector.shape_cast %96 : vector<8x8xf32> to vector<1x8x8xf32>
    %101 = vector.shape_cast %97 : vector<8x8xf32> to vector<1x8x8xf32>
    %102 = vector.shape_cast %98 : vector<8x8xf32> to vector<1x8x8xf32>
    %103 = vector.shape_cast %99 : vector<8x8xf32> to vector<1x8x8xf32>
    %104 = tpu.concatenate %100, %101, %102, %103 in 0 : vector<1x8x8xf32>, vector<1x8x8xf32>, vector<1x8x8xf32>, vector<1x8x8xf32> -> vector<4x8x8xf32>
    %105 = arith.truncf %86 : vector<4x8x8xf32> to vector<4x8x8xbf16>
    %106 = arith.truncf %95 : vector<4x8x8xf32> to vector<4x8x8xbf16>
    "tpu.trace_start"() <{level = 10 : i32, message = "hqd,hkd->hqk"}> : () -> ()
    %cst_34 = arith.constant dense<0.000000e+00> : vector<4x8x8xf32>
    %107 = tpu.matmul %105, %106, %cst_34 {dimension_numbers = #tpu.dot_dimension_numbers<[2], [2], [1], [1], [0, 0, 0, 1, 1, 1], [0], [0]>} : vector<4x8x8xbf16>, vector<4x8x8xbf16>, vector<4x8x8xf32> -> vector<4x8x8xf32>
    "tpu.trace_stop"() : () -> ()
    %cst_35 = arith.constant 0.353553385 : f32
    %108 = vector.broadcast %cst_35 : f32 to vector<4x8x8xf32>
    %109 = arith.mulf %107, %108 : vector<4x8x8xf32>
    %cst_36 = arith.constant dense<0xFF800000> : vector<4x8xf32>
    %110 = vector.multi_reduction <maximumf>, %109, %cst_36 [2] : vector<4x8x8xf32> to vector<4x8xf32>
    %111 = vector.shape_cast %110 : vector<4x8xf32> to vector<4x8x1xf32>
    %112 = vector.broadcast %111 : vector<4x8x1xf32> to vector<4x8x8xf32>
    %113 = arith.subf %109, %112 : vector<4x8x8xf32>
    %114 = math.exp %113 : vector<4x8x8xf32>
    %cst_37 = arith.constant dense<0.000000e+00> : vector<4x8xf32>
    %115 = vector.multi_reduction <add>, %114, %cst_37 [2] : vector<4x8x8xf32> to vector<4x8xf32>
    %116 = vector.shape_cast %115 : vector<4x8xf32> to vector<4x8x1xf32>
    %117 = arith.truncf %114 : vector<4x8x8xf32> to vector<4x8x8xbf16>
    %118 = arith.truncf %104 : vector<4x8x8xf32> to vector<4x8x8xbf16>
    "tpu.trace_start"() <{level = 10 : i32, message = "hqk,hkd->hqd"}> : () -> ()
    %cst_38 = arith.constant dense<0.000000e+00> : vector<4x8x8xf32>
    %119 = tpu.matmul %117, %118, %cst_38 {dimension_numbers = #tpu.dot_dimension_numbers<[2], [1], [1], [2], [0, 0, 0, 1, 1, 2], [0], [0]>} : vector<4x8x8xbf16>, vector<4x8x8xbf16>, vector<4x8x8xf32> -> vector<4x8x8xf32>
    "tpu.trace_stop"() : () -> ()
    %120 = tpu.reciprocal %116 {approx = true} : vector<4x8x1xf32> -> vector<4x8x1xf32>
    %121 = vector.broadcast %120 : vector<4x8x1xf32> to vector<4x8x8xf32>
    %122 = arith.mulf %119, %121 : vector<4x8x8xf32>
    %123 = vector.extract_strided_slice %122 {offsets = [0, 0, 0], sizes = [1, 8, 8], strides = [1, 1, 1]} : vector<4x8x8xf32> to vector<1x8x8xf32>
    %124 = vector.shape_cast %123 : vector<1x8x8xf32> to vector<8x8xf32>
    %125 = vector.extract_strided_slice %122 {offsets = [1, 0, 0], sizes = [1, 8, 8], strides = [1, 1, 1]} : vector<4x8x8xf32> to vector<1x8x8xf32>
    %126 = vector.shape_cast %125 : vector<1x8x8xf32> to vector<8x8xf32>
    %127 = vector.extract_strided_slice %122 {offsets = [2, 0, 0], sizes = [1, 8, 8], strides = [1, 1, 1]} : vector<4x8x8xf32> to vector<1x8x8xf32>
    %128 = vector.shape_cast %127 : vector<1x8x8xf32> to vector<8x8xf32>
    %129 = vector.extract_strided_slice %122 {offsets = [3, 0, 0], sizes = [1, 8, 8], strides = [1, 1, 1]} : vector<4x8x8xf32> to vector<1x8x8xf32>
    %130 = vector.shape_cast %129 : vector<1x8x8xf32> to vector<8x8xf32>
    %131 = tpu.concatenate %124, %126, %128, %130 in 1 : vector<8x8xf32>, vector<8x8xf32>, vector<8x8xf32>, vector<8x8xf32> -> vector<8x32xf32>
    %132 = arith.truncf %131 : vector<8x32xf32> to vector<8x32xbf16>
    %c0_39 = arith.constant 0 : index
    %c0_40 = arith.constant 0 : index
    %133 = vector.load %arg11[%c0_39, %c0_40] : memref<32x32xbf16, #tpu.memory_space<vmem>>, vector<32x32xbf16>
    %cst_41 = arith.constant dense<0.000000e+00> : vector<8x32xf32>
    %134 = tpu.matmul %132, %133, %cst_41 {dimension_numbers = #tpu.dot_dimension_numbers<[1], [0], [0], [1], [0, 0, 1, 1], [], []>} : vector<8x32xbf16>, vector<32x32xbf16>, vector<8x32xf32> -> vector<8x32xf32>
    %c0_42 = arith.constant 0 : index
    %c0_43 = arith.constant 0 : index
    %135 = vector.load %arg12[%c0_42, %c0_43] : memref<1x32xf32, #tpu.memory_space<vmem>>, vector<1x32xf32>
    %136 = vector.broadcast %135 : vector<1x32xf32> to vector<8x32xf32>
    %137 = arith.addf %134, %136 : vector<8x32xf32>
    %138 = vector.broadcast %8 : vector<1x32xf32> to vector<8x32xf32>
    %139 = arith.mulf %138, %137 : vector<8x32xf32>
    %140 = arith.addf %1, %139 : vector<8x32xf32>
    %cst_44 = arith.constant dense<0.000000e+00> : vector<8xf32>
    %141 = vector.multi_reduction <add>, %140, %cst_44 [1] : vector<8x32xf32> to vector<8xf32>
    %142 = vector.shape_cast %141 : vector<8xf32> to vector<8x1xf32>
    %cst_45 = arith.constant 3.200000e+01 : f32
    %143 = vector.broadcast %cst_45 : f32 to vector<8x1xf32>
    %144 = arith.divf %142, %143 : vector<8x1xf32>
    %145 = arith.mulf %140, %140 : vector<8x32xf32>
    %cst_46 = arith.constant dense<0.000000e+00> : vector<8xf32>
    %146 = vector.multi_reduction <add>, %145, %cst_46 [1] : vector<8x32xf32> to vector<8xf32>
    %147 = vector.shape_cast %146 : vector<8xf32> to vector<8x1xf32>
    %cst_47 = arith.constant 3.200000e+01 : f32
    %148 = vector.broadcast %cst_47 : f32 to vector<8x1xf32>
    %149 = arith.divf %147, %148 : vector<8x1xf32>
    %150 = arith.mulf %144, %144 : vector<8x1xf32>
    %151 = arith.subf %149, %150 : vector<8x1xf32>
    %152 = vector.broadcast %144 : vector<8x1xf32> to vector<8x32xf32>
    %153 = arith.subf %140, %152 : vector<8x32xf32>
    %cst_48 = arith.constant 9.99999997E-7 : f32
    %154 = vector.broadcast %cst_48 : f32 to vector<8x1xf32>
    %155 = arith.addf %151, %154 : vector<8x1xf32>
    %156 = math.rsqrt %155 : vector<8x1xf32>
    %157 = vector.broadcast %156 : vector<8x1xf32> to vector<8x32xf32>
    %158 = arith.mulf %153, %157 : vector<8x32xf32>
    %cst_49 = arith.constant 1.000000e+00 : f32
    %159 = vector.broadcast %cst_49 : f32 to vector<1x32xf32>
    %160 = arith.addf %159, %10 : vector<1x32xf32>
    %161 = vector.broadcast %160 : vector<1x32xf32> to vector<8x32xf32>
    %162 = arith.mulf %158, %161 : vector<8x32xf32>
    %163 = vector.broadcast %9 : vector<1x32xf32> to vector<8x32xf32>
    %164 = arith.addf %162, %163 : vector<8x32xf32>
    %165 = arith.truncf %164 : vector<8x32xf32> to vector<8x32xbf16>
    %c0_50 = arith.constant 0 : index
    %c0_51 = arith.constant 0 : index
    %166 = vector.load %arg13[%c0_50, %c0_51] : memref<32x128xbf16, #tpu.memory_space<vmem>>, vector<32x128xbf16>
    %cst_52 = arith.constant dense<0.000000e+00> : vector<8x128xf32>
    %167 = tpu.matmul %165, %166, %cst_52 {dimension_numbers = #tpu.dot_dimension_numbers<[1], [0], [0], [1], [0, 0, 1, 1], [], []>} : vector<8x32xbf16>, vector<32x128xbf16>, vector<8x128xf32> -> vector<8x128xf32>
    %c0_53 = arith.constant 0 : index
    %c0_54 = arith.constant 0 : index
    %168 = vector.load %arg14[%c0_53, %c0_54] : memref<1x128xf32, #tpu.memory_space<vmem>>, vector<1x128xf32>
    %169 = vector.broadcast %168 : vector<1x128xf32> to vector<8x128xf32>
    %170 = arith.addf %167, %169 : vector<8x128xf32>
    %cst_55 = arith.constant 5.000000e-01 : f32
    %171 = vector.broadcast %cst_55 : f32 to vector<8x128xf32>
    %172 = arith.mulf %171, %170 : vector<8x128xf32>
    %cst_56 = arith.constant 4.471500e-02 : f32
    %173 = vector.broadcast %cst_56 : f32 to vector<8x128xf32>
    %174 = arith.mulf %173, %170 : vector<8x128xf32>
    %175 = arith.mulf %174, %170 : vector<8x128xf32>
    %176 = arith.mulf %175, %170 : vector<8x128xf32>
    %177 = arith.addf %170, %176 : vector<8x128xf32>
    %cst_57 = arith.constant 0.797884583 : f32
    %178 = vector.broadcast %cst_57 : f32 to vector<8x128xf32>
    %179 = arith.mulf %178, %177 : vector<8x128xf32>
    %180 = math.tanh %179 : vector<8x128xf32>
    %cst_58 = arith.constant 1.000000e+00 : f32
    %181 = vector.broadcast %cst_58 : f32 to vector<8x128xf32>
    %182 = arith.addf %181, %180 : vector<8x128xf32>
    %183 = arith.mulf %172, %182 : vector<8x128xf32>
    %184 = arith.truncf %183 : vector<8x128xf32> to vector<8x128xbf16>
    %c0_59 = arith.constant 0 : index
    %c0_60 = arith.constant 0 : index
    %185 = vector.load %arg15[%c0_59, %c0_60] : memref<128x32xbf16, #tpu.memory_space<vmem>>, vector<128x32xbf16>
    %cst_61 = arith.constant dense<0.000000e+00> : vector<8x32xf32>
    %186 = tpu.matmul %184, %185, %cst_61 {dimension_numbers = #tpu.dot_dimension_numbers<[1], [0], [0], [1], [0, 0, 1, 1], [], []>} : vector<8x128xbf16>, vector<128x32xbf16>, vector<8x32xf32> -> vector<8x32xf32>
    %c0_62 = arith.constant 0 : index
    %c0_63 = arith.constant 0 : index
    %187 = vector.load %arg16[%c0_62, %c0_63] : memref<1x32xf32, #tpu.memory_space<vmem>>, vector<1x32xf32>
    %188 = vector.broadcast %187 : vector<1x32xf32> to vector<8x32xf32>
    %189 = arith.addf %186, %188 : vector<8x32xf32>
    %190 = vector.broadcast %11 : vector<1x32xf32> to vector<8x32xf32>
    %191 = arith.mulf %190, %189 : vector<8x32xf32>
    %192 = arith.addf %140, %191 : vector<8x32xf32>
    %c0_64 = arith.constant 0 : index
    %c0_65 = arith.constant 0 : index
    %c0_66 = arith.constant 0 : index
    %193 = vector.load %arg17[%c0_64, %c0_65, %c0_66] : memref<1x8x32xf32, #tpu.memory_space<vmem>>, vector<1x8x32xf32>
    %194 = vector.shape_cast %193 : vector<1x8x32xf32> to vector<8x32xf32>
    %195 = vector.shape_cast %192 : vector<8x32xf32> to vector<1x8x32xf32>
    tpu.vector_store %arg17[%c0_64, %c0_65, %c0_66], %195 {strides = array<i32>} : memref<1x8x32xf32, #tpu.memory_space<vmem>>, vector<1x8x32xf32>,
    return
  }
  func.func @transform_0(%arg0: i32, %arg1: i32) -> (i32, i32, i32) {
    %c0_i32 = arith.constant 0 : i32
    %c0_i32_0 = arith.constant 0 : i32
    return %arg0, %arg1, %c0_i32 : i32, i32, i32
  }
  func.func @transform_1(%arg0: i32, %arg1: i32) -> (i32, i32, i32) {
    %c0_i32 = arith.constant 0 : i32
    %c0_i32_0 = arith.constant 0 : i32
    %c0_i32_1 = arith.constant 0 : i32
    return %arg0, %c0_i32, %c0_i32_0 : i32, i32, i32
  }
  func.func @transform_2(%arg0: i32, %arg1: i32) -> (i32, i32, i32) {
    %c0_i32 = arith.constant 0 : i32
    %c0_i32_0 = arith.constant 0 : i32
    %c0_i32_1 = arith.constant 0 : i32
    return %arg0, %c0_i32, %c0_i32_0 : i32, i32, i32
  }
  func.func @transform_3(%arg0: i32, %arg1: i32) -> (i32, i32) {
    %c0_i32 = arith.constant 0 : i32
    %c0_i32_0 = arith.constant 0 : i32
    %c0_i32_1 = arith.constant 0 : i32
    return %c0_i32, %c0_i32_0 : i32, i32
  }
  func.func @transform_4(%arg0: i32, %arg1: i32) -> (i32, i32) {
    %c0_i32 = arith.constant 0 : i32
    %c0_i32_0 = arith.constant 0 : i32
    %c0_i32_1 = arith.constant 0 : i32
    return %c0_i32, %c0_i32_0 : i32, i32
  }
  func.func @transform_5(%arg0: i32, %arg1: i32) -> (i32, i32) {
    %c0_i32 = arith.constant 0 : i32
    %c0_i32_0 = arith.constant 0 : i32
    %c0_i32_1 = arith.constant 0 : i32
    return %c0_i32, %c0_i32_0 : i32, i32
  }
  func.func @transform_6(%arg0: i32, %arg1: i32) -> (i32, i32) {
    %c0_i32 = arith.constant 0 : i32
    %c0_i32_0 = arith.constant 0 : i32
    %c0_i32_1 = arith.constant 0 : i32
    return %c0_i32, %c0_i32_0 : i32, i32
  }
  func.func @transform_7(%arg0: i32, %arg1: i32) -> (i32, i32) {
    %c0_i32 = arith.constant 0 : i32
    %c0_i32_0 = arith.constant 0 : i32
    %c0_i32_1 = arith.constant 0 : i32
    return %c0_i32, %c0_i32_0 : i32, i32
  }
  func.func @transform_8(%arg0: i32, %arg1: i32) -> (i32, i32) {
    %c0_i32 = arith.constant 0 : i32
    %c0_i32_0 = arith.constant 0 : i32
    %c0_i32_1 = arith.constant 0 : i32
    return %c0_i32, %c0_i32_0 : i32, i32
  }
  func.func @transform_9(%arg0: i32, %arg1: i32) -> (i32, i32) {
    %c0_i32 = arith.constant 0 : i32
    %c0_i32_0 = arith.constant 0 : i32
    %c0_i32_1 = arith.constant 0 : i32
    return %c0_i32, %c0_i32_0 : i32, i32
  }
  func.func @transform_10(%arg0: i32, %arg1: i32) -> (i32, i32) {
    %c0_i32 = arith.constant 0 : i32
    %c0_i32_0 = arith.constant 0 : i32
    %c0_i32_1 = arith.constant 0 : i32
    return %c0_i32, %c0_i32_0 : i32, i32
  }
  func.func @transform_11(%arg0: i32, %arg1: i32) -> (i32, i32) {
    %c0_i32 = arith.constant 0 : i32
    %c0_i32_0 = arith.constant 0 : i32
    %c0_i32_1 = arith.constant 0 : i32
    return %c0_i32, %c0_i32_0 : i32, i32
  }
  func.func @transform_12(%arg0: i32, %arg1: i32) -> (i32, i32) {
    %c0_i32 = arith.constant 0 : i32
    %c0_i32_0 = arith.constant 0 : i32
    %c0_i32_1 = arith.constant 0 : i32
    return %c0_i32, %c0_i32_0 : i32, i32
  }
  func.func @transform_13(%arg0: i32, %arg1: i32) -> (i32, i32) {
    %c0_i32 = arith.constant 0 : i32
    %c0_i32_0 = arith.constant 0 : i32
    %c0_i32_1 = arith.constant 0 : i32
    return %c0_i32, %c0_i32_0 : i32, i32
  }
  func.func @transform_14(%arg0: i32, %arg1: i32) -> (i32, i32) {
    %c0_i32 = arith.constant 0 : i32
    %c0_i32_0 = arith.constant 0 : i32
    %c0_i32_1 = arith.constant 0 : i32
    return %c0_i32, %c0_i32_0 : i32, i32
  }
  func.func @transform_15(%arg0: i32, %arg1: i32) -> (i32, i32, i32) {
    %c0_i32 = arith.constant 0 : i32
    %c0_i32_0 = arith.constant 0 : i32
    return %arg0, %arg1, %c0_i32 : i32, i32, i32
  }
}

</mosaic_0001>

<llo_original>
// kernel: dit_ode_block_forward.1
$region0: #{dit_ode_block_forward.1}
  #allocation0 [shape = 'u32[]', space=smem, size = 0x4, offset = 0x4, fixed_abs, tag = 'smem constant byte address 0x4 - core index']
  #allocation1 [shape = 'u32[144,128]{1,0:T(1,128)}', space=vmem, size = 0x12000, scoped, tag = 'internal scratch']
  %s0 = inlined_call_operand.vmem [shape: f32[2,8,32], index: 0, kind: input, shape index: {}, may-alias: {0,1}]
  %s1 = inlined_call_operand.vmem [shape: f32[2,8,32], index: 1, kind: input, shape index: {}, may-alias: {0,1}]
  %s2 = inlined_call_operand.vmem [shape: f32[2,6,32], index: 2, kind: input, shape index: {}]
  %s3 = inlined_call_operand.vmem [shape: bf16[32,32], index: 3, kind: input, shape index: {}]
  %s4 = inlined_call_operand.vmem [shape: f32[1,32], index: 4, kind: input, shape index: {}]
  %s5 = inlined_call_operand.vmem [shape: bf16[32,32], index: 5, kind: input, shape index: {}]
  %s6 = inlined_call_operand.vmem [shape: f32[1,32], index: 6, kind: input, shape index: {}]
  %s7 = inlined_call_operand.vmem [shape: bf16[32,32], index: 7, kind: input, shape index: {}]
  %s8 = inlined_call_operand.vmem [shape: f32[1,32], index: 8, kind: input, shape index: {}]
  %s9 = inlined_call_operand.vmem [shape: bf16[32,32], index: 9, kind: input, shape index: {}]
  %s10 = inlined_call_operand.vmem [shape: f32[1,32], index: 10, kind: input, shape index: {}]
  %s11 = inlined_call_operand.vmem [shape: bf16[32,128], index: 11, kind: input, shape index: {}]
  %s12 = inlined_call_operand.vmem [shape: f32[1,128], index: 12, kind: input, shape index: {}]
  %s13 = inlined_call_operand.vmem [shape: bf16[128,32], index: 13, kind: input, shape index: {}]
  %s14 = inlined_call_operand.vmem [shape: f32[1,32], index: 14, kind: input, shape index: {}]
  %s15 = inlined_call_operand.vmem [shape: f32[2,8,32], index: 15, kind: output, shape index: {}]
  %s16 = sld [smem:[#allocation0]]
  $region93: #{dit_ode_block_forward.1} parent=0
    _
  %s18 = ssub.s32 1, %s16
  %s19 = scalar_select 0, %s18, %s16
  loop: start=0, step=1, limit=4
  $region2: #{dit_ode_block_forward.1} parent=0 // loop_pre_header
    _
  $region3: #{dit_ode_block_forward.1} parent=0 // loop_header
    %s21 = sphi 0, %s25
    %p22 = scmp.ge.s32.totalorder %s21, 4
    %s28 = sphi 0, %s40
    %s29 = sphi 0, %s36
    %s30 = sphi 0, %s28
    %s31 = sphi 0, %s29
    %s32 = sphi 0, %s30
    %s33 = sphi 0, %s31
    %s45 = sphi 0, %s47
    %s48 = sphi 0, %s45
    %s49 = sphi 0, %s48
    %s65 = sphi 0, %s49
    %s71 = sphi 0, %s73
    %s74 = sphi 0, %s71
    %s75 = sphi 0, %s74
    %s91 = sphi 0, %s75
    %s97 = sphi 0, %s99
    %s100 = sphi 0, %s97
    %s101 = sphi 0, %s100
    %s117 = sphi 0, %s101
    %s121 = sphi 0, %s121
    %s123 = sphi 0, %s121
    %s124 = sphi 0, %s123
    %s138 = sphi 0, %s124
    %s142 = sphi 0, %s142
    %s144 = sphi 0, %s142
    %s145 = sphi 0, %s144
    %s159 = sphi 0, %s145
    %s163 = sphi 0, %s163
    %s165 = sphi 0, %s163
    %s166 = sphi 0, %s165
    %s180 = sphi 0, %s166
    %s184 = sphi 0, %s184
    %s186 = sphi 0, %s184
    %s187 = sphi 0, %s186
    %s201 = sphi 0, %s187
    %s205 = sphi 0, %s205
    %s207 = sphi 0, %s205
    %s208 = sphi 0, %s207
    %s222 = sphi 0, %s208
    %s226 = sphi 0, %s226
    %s228 = sphi 0, %s226
    %s229 = sphi 0, %s228
    %s243 = sphi 0, %s229
    %s247 = sphi 0, %s247
    %s249 = sphi 0, %s247
    %s250 = sphi 0, %s249
    %s264 = sphi 0, %s250
    %s268 = sphi 0, %s268
    %s270 = sphi 0, %s268
    %s271 = sphi 0, %s270
    %s285 = sphi 0, %s271
    %s289 = sphi 0, %s289
    %s291 = sphi 0, %s289
    %s292 = sphi 0, %s291
    %s306 = sphi 0, %s292
    %s310 = sphi 0, %s310
    %s312 = sphi 0, %s310
    %s313 = sphi 0, %s312
    %s327 = sphi 0, %s313
    %s331 = sphi 0, %s331
    %s333 = sphi 0, %s331
    %s334 = sphi 0, %s333
    %s348 = sphi 0, %s334
    %s352 = sphi 0, %s352
    %s354 = sphi 0, %s352
    %s355 = sphi 0, %s354
    %s369 = sphi 0, %s355
    %s377 = sphi 0, %s379
    %s380 = sphi 0, %s377
    %s381 = sphi 0, %s380
    %s397 = sphi 0, %s381
  $region4: #{dit_ode_block_forward.1} parent=0 // loop_header_branch
    %24 = sbr.rel (%p22) target = $region8
  $region5: #{dit_ode_block_forward.1} parent=0 // loop_body
    %s26 = ssub.s32 %s21, 1
    %s27 = ssub.s32 %s21, 2
    %s34 = sadd.s32 1, %s29
    %p35 = scmp.ge.s32.totalorder %s34, 1
    %s36 = scalar_select %p35, 0, %s34
    %s37 = sadd.s32 1, %s28
    %s38 = scalar_select %p35, %s37, %s28
    %p39 = scmp.ge.s32.totalorder %s38, 2
    %s40 = scalar_select %p39, 0, %s38
    %s41 = ssub.s32 %s28, %s40
    %s42 = ssub.s32 %s29, %s36
    %s43 = sor.u32 %s41, %s42
    %p44 = scmp.eq.s32.totalorder %s43, 0
    %s46 = sadd.s32 %s45, 1
    %s47 = scalar_select %p44, %s45, %s46
    %p50 = pneg %p44
    %p51 = scmp.eq.s32.totalorder %s21, 1
    %p52 = por %p50, %p51
    %p53 = scmp.ne.s32.totalorder %s45, %s48
    %p54 = scmp.eq.s32.totalorder %s21, 0
    %p55 = por %p53, %p54
    %p56 = scmp.ne.s32.totalorder %s45, %s48
    %p57 = scmp.eq.s32.totalorder %s26, 1
    %p58 = por %p56, %p57
    %p59 = scmp.ne.s32.totalorder %s48, %s49
    %p60 = scmp.eq.s32.totalorder %s26, 0
    %p61 = por %p59, %p60
    %p62 = scmp.ne.s32.totalorder %s48, %s49
    %p63 = scmp.eq.s32.totalorder %s27, 1
    %p64 = por %p62, %p63
    %p66 = scmp.ne.s32.totalorder %s49, %s65
    %p67 = scmp.eq.s32.totalorder %s27, 0
    %p68 = por %p66, %p67
    %s69 = ssub.s32 %s28, %s40
    %p70 = scmp.eq.s32.totalorder %s69, 0
    %s72 = sadd.s32 %s71, 1
    %s73 = scalar_select %p70, %s71, %s72
    %p76 = pneg %p70
    %p77 = scmp.eq.s32.totalorder %s21, 1
    %p78 = por %p76, %p77
    %p79 = scmp.ne.s32.totalorder %s71, %s74
    %p80 = scmp.eq.s32.totalorder %s21, 0
    %p81 = por %p79, %p80
    %p82 = scmp.ne.s32.totalorder %s71, %s74
    %p83 = scmp.eq.s32.totalorder %s26, 1
    %p84 = por %p82, %p83
    %p85 = scmp.ne.s32.totalorder %s74, %s75
    %p86 = scmp.eq.s32.totalorder %s26, 0
    %p87 = por %p85, %p86
    %p88 = scmp.ne.s32.totalorder %s74, %s75
    %p89 = scmp.eq.s32.totalorder %s27, 1
    %p90 = por %p88, %p89
    %p92 = scmp.ne.s32.totalorder %s75, %s91
    %p93 = scmp.eq.s32.totalorder %s27, 0
    %p94 = por %p92, %p93
    %s95 = ssub.s32 %s28, %s40
    %p96 = scmp.eq.s32.totalorder %s95, 0
    %s98 = sadd.s32 %s97, 1
    %s99 = scalar_select %p96, %s97, %s98
    %p102 = pneg %p96
    %p103 = scmp.eq.s32.totalorder %s21, 1
    %p104 = por %p102, %p103
    %p105 = scmp.ne.s32.totalorder %s97, %s100
    %p106 = scmp.eq.s32.totalorder %s21, 0
    %p107 = por %p105, %p106
    %p108 = scmp.ne.s32.totalorder %s97, %s100
    %p109 = scmp.eq.s32.totalorder %s26, 1
    %p110 = por %p108, %p109
    %p111 = scmp.ne.s32.totalorder %s100, %s101
    %p112 = scmp.eq.s32.totalorder %s26, 0
    %p113 = por %p111, %p112
    %p114 = scmp.ne.s32.totalorder %s100, %s101
    %p115 = scmp.eq.s32.totalorder %s27, 1
    %p116 = por %p114, %p115
    %p118 = scmp.ne.s32.totalorder %s101, %s117
    %p119 = scmp.eq.s32.totalorder %s27, 0
    %p120 = por %p118, %p119
    %s122 = sadd.s32 %s121, 1
    %p125 = scmp.eq.s32.totalorder %s21, 1
    %p126 = scmp.ne.s32.totalorder %s121, %s123
    %p127 = scmp.eq.s32.totalorder %s21, 0
    %p128 = por %p126, %p127
    %p129 = scmp.ne.s32.totalorder %s121, %s123
    %p130 = scmp.eq.s32.totalorder %s26, 1
    %p131 = por %p129, %p130
    %p132 = scmp.ne.s32.totalorder %s123, %s124
    %p133 = scmp.eq.s32.totalorder %s26, 0
    %p134 = por %p132, %p133
    %p135 = scmp.ne.s32.totalorder %s123, %s124
    %p136 = scmp.eq.s32.totalorder %s27, 1
    %p137 = por %p135, %p136
    %p139 = scmp.ne.s32.totalorder %s124, %s138
    %p140 = scmp.eq.s32.totalorder %s27, 0
    %p141 = por %p139, %p140
    %s143 = sadd.s32 %s142, 1
    %p146 = scmp.eq.s32.totalorder %s21, 1
    %p147 = scmp.ne.s32.totalorder %s142, %s144
    %p148 = scmp.eq.s32.totalorder %s21, 0
    %p149 = por %p147, %p148
    %p150 = scmp.ne.s32.totalorder %s142, %s144
    %p151 = scmp.eq.s32.totalorder %s26, 1
    %p152 = por %p150, %p151
    %p153 = scmp.ne.s32.totalorder %s144, %s145
    %p154 = scmp.eq.s32.totalorder %s26, 0
    %p155 = por %p153, %p154
    %p156 = scmp.ne.s32.totalorder %s144, %s145
    %p157 = scmp.eq.s32.totalorder %s27, 1
    %p158 = por %p156, %p157
    %p160 = scmp.ne.s32.totalorder %s145, %s159
    %p161 = scmp.eq.s32.totalorder %s27, 0
    %p162 = por %p160, %p161
    %s164 = sadd.s32 %s163, 1
    %p167 = scmp.eq.s32.totalorder %s21, 1
    %p168 = scmp.ne.s32.totalorder %s163, %s165
    %p169 = scmp.eq.s32.totalorder %s21, 0
    %p170 = por %p168, %p169
    %p171 = scmp.ne.s32.totalorder %s163, %s165
    %p172 = scmp.eq.s32.totalorder %s26, 1
    %p173 = por %p171, %p172
    %p174 = scmp.ne.s32.totalorder %s165, %s166
    %p175 = scmp.eq.s32.totalorder %s26, 0
    %p176 = por %p174, %p175
    %p177 = scmp.ne.s32.totalorder %s165, %s166
    %p178 = scmp.eq.s32.totalorder %s27, 1
    %p179 = por %p177, %p178
    %p181 = scmp.ne.s32.totalorder %s166, %s180
    %p182 = scmp.eq.s32.totalorder %s27, 0
    %p183 = por %p181, %p182
    %s185 = sadd.s32 %s184, 1
    %p188 = scmp.eq.s32.totalorder %s21, 1
    %p189 = scmp.ne.s32.totalorder %s184, %s186
    %p190 = scmp.eq.s32.totalorder %s21, 0
    %p191 = por %p189, %p190
    %p192 = scmp.ne.s32.totalorder %s184, %s186
    %p193 = scmp.eq.s32.totalorder %s26, 1
    %p194 = por %p192, %p193
    %p195 = scmp.ne.s32.totalorder %s186, %s187
    %p196 = scmp.eq.s32.totalorder %s26, 0
    %p197 = por %p195, %p196
    %p198 = scmp.ne.s32.totalorder %s186, %s187
    %p199 = scmp.eq.s32.totalorder %s27, 1
    %p200 = por %p198, %p199
    %p202 = scmp.ne.s32.totalorder %s187, %s201
    %p203 = scmp.eq.s32.totalorder %s27, 0
    %p204 = por %p202, %p203
    %s206 = sadd.s32 %s205, 1
    %p209 = scmp.eq.s32.totalorder %s21, 1
    %p210 = scmp.ne.s32.totalorder %s205, %s207
    %p211 = scmp.eq.s32.totalorder %s21, 0
    %p212 = por %p210, %p211
    %p213 = scmp.ne.s32.totalorder %s205, %s207
    %p214 = scmp.eq.s32.totalorder %s26, 1
    %p215 = por %p213, %p214
    %p216 = scmp.ne.s32.totalorder %s207, %s208
    %p217 = scmp.eq.s32.totalorder %s26, 0
    %p218 = por %p216, %p217
    %p219 = scmp.ne.s32.totalorder %s207, %s208
    %p220 = scmp.eq.s32.totalorder %s27, 1
    %p221 = por %p219, %p220
    %p223 = scmp.ne.s32.totalorder %s208, %s222
    %p224 = scmp.eq.s32.totalorder %s27, 0
    %p225 = por %p223, %p224
    %s227 = sadd.s32 %s226, 1
    %p230 = scmp.eq.s32.totalorder %s21, 1
    %p231 = scmp.ne.s32.totalorder %s226, %s228
    %p232 = scmp.eq.s32.totalorder %s21, 0
    %p233 = por %p231, %p232
    %p234 = scmp.ne.s32.totalorder %s226, %s228
    %p235 = scmp.eq.s32.totalorder %s26, 1
    %p236 = por %p234, %p235
    %p237 = scmp.ne.s32.totalorder %s228, %s229
    %p238 = scmp.eq.s32.totalorder %s26, 0
    %p239 = por %p237, %p238
    %p240 = scmp.ne.s32.totalorder %s228, %s229
    %p241 = scmp.eq.s32.totalorder %s27, 1
    %p242 = por %p240, %p241
    %p244 = scmp.ne.s32.totalorder %s229, %s243
    %p245 = scmp.eq.s32.totalorder %s27, 0
    %p246 = por %p244, %p245
    %s248 = sadd.s32 %s247, 1
    %p251 = scmp.eq.s32.totalorder %s21, 1
    %p252 = scmp.ne.s32.totalorder %s247, %s249
    %p253 = scmp.eq.s32.totalorder %s21, 0
    %p254 = por %p252, %p253
    %p255 = scmp.ne.s32.totalorder %s247, %s249
    %p256 = scmp.eq.s32.totalorder %s26, 1
    %p257 = por %p255, %p256
    %p258 = scmp.ne.s32.totalorder %s249, %s250
    %p259 = scmp.eq.s32.totalorder %s26, 0
    %p260 = por %p258, %p259
    %p261 = scmp.ne.s32.totalorder %s249, %s250
    %p262 = scmp.eq.s32.totalorder %s27, 1
    %p263 = por %p261, %p262
    %p265 = scmp.ne.s32.totalorder %s250, %s264
    %p266 = scmp.eq.s32.totalorder %s27, 0
    %p267 = por %p265, %p266
    %s269 = sadd.s32 %s268, 1
    %p272 = scmp.eq.s32.totalorder %s21, 1
    %p273 = scmp.ne.s32.totalorder %s268, %s270
    %p274 = scmp.eq.s32.totalorder %s21, 0
    %p275 = por %p273, %p274
    %p276 = scmp.ne.s32.totalorder %s268, %s270
    %p277 = scmp.eq.s32.totalorder %s26, 1
    %p278 = por %p276, %p277
    %p279 = scmp.ne.s32.totalorder %s270, %s271
    %p280 = scmp.eq.s32.totalorder %s26, 0
    %p281 = por %p279, %p280
    %p282 = scmp.ne.s32.totalorder %s270, %s271
    %p283 = scmp.eq.s32.totalorder %s27, 1
    %p284 = por %p282, %p283
    %p286 = scmp.ne.s32.totalorder %s271, %s285
    %p287 = scmp.eq.s32.totalorder %s27, 0
    %p288 = por %p286, %p287
    %s290 = sadd.s32 %s289, 1
    %p293 = scmp.eq.s32.totalorder %s21, 1
    %p294 = scmp.ne.s32.totalorder %s289, %s291
    %p295 = scmp.eq.s32.totalorder %s21, 0
    %p296 = por %p294, %p295
    %p297 = scmp.ne.s32.totalorder %s289, %s291
    %p298 = scmp.eq.s32.totalorder %s26, 1
    %p299 = por %p297, %p298
    %p300 = scmp.ne.s32.totalorder %s291, %s292
    %p301 = scmp.eq.s32.totalorder %s26, 0
    %p302 = por %p300, %p301
    %p303 = scmp.ne.s32.totalorder %s291, %s292
    %p304 = scmp.eq.s32.totalorder %s27, 1
    %p305 = por %p303, %p304
    %p307 = scmp.ne.s32.totalorder %s292, %s306
    %p308 = scmp.eq.s32.totalorder %s27, 0
    %p309 = por %p307, %p308
    %s311 = sadd.s32 %s310, 1
    %p314 = scmp.eq.s32.totalorder %s21, 1
    %p315 = scmp.ne.s32.totalorder %s310, %s312
    %p316 = scmp.eq.s32.totalorder %s21, 0
    %p317 = por %p315, %p316
    %p318 = scmp.ne.s32.totalorder %s310, %s312
    %p319 = scmp.eq.s32.totalorder %s26, 1
    %p320 = por %p318, %p319
    %p321 = scmp.ne.s32.totalorder %s312, %s313
    %p322 = scmp.eq.s32.totalorder %s26, 0
    %p323 = por %p321, %p322
    %p324 = scmp.ne.s32.totalorder %s312, %s313
    %p325 = scmp.eq.s32.totalorder %s27, 1
    %p326 = por %p324, %p325
    %p328 = scmp.ne.s32.totalorder %s313, %s327
    %p329 = scmp.eq.s32.totalorder %s27, 0
    %p330 = por %p328, %p329
    %s332 = sadd.s32 %s331, 1
    %p335 = scmp.eq.s32.totalorder %s21, 1
    %p336 = scmp.ne.s32.totalorder %s331, %s333
    %p337 = scmp.eq.s32.totalorder %s21, 0
    %p338 = por %p336, %p337
    %p339 = scmp.ne.s32.totalorder %s331, %s333
    %p340 = scmp.eq.s32.totalorder %s26, 1
    %p341 = por %p339, %p340
    %p342 = scmp.ne.s32.totalorder %s333, %s334
    %p343 = scmp.eq.s32.totalorder %s26, 0
    %p344 = por %p342, %p343
    %p345 = scmp.ne.s32.totalorder %s333, %s334
    %p346 = scmp.eq.s32.totalorder %s27, 1
    %p347 = por %p345, %p346
    %p349 = scmp.ne.s32.totalorder %s334, %s348
    %p350 = scmp.eq.s32.totalorder %s27, 0
    %p351 = por %p349, %p350
    %s353 = sadd.s32 %s352, 1
    %p356 = scmp.eq.s32.totalorder %s21, 1
    %p357 = scmp.ne.s32.totalorder %s352, %s354
    %p358 = scmp.eq.s32.totalorder %s21, 0
    %p359 = por %p357, %p358
    %p360 = scmp.ne.s32.totalorder %s352, %s354
    %p361 = scmp.eq.s32.totalorder %s26, 1
    %p362 = por %p360, %p361
    %p363 = scmp.ne.s32.totalorder %s354, %s355
    %p364 = scmp.eq.s32.totalorder %s26, 0
    %p365 = por %p363, %p364
    %p366 = scmp.ne.s32.totalorder %s354, %s355
    %p367 = scmp.eq.s32.totalorder %s27, 1
    %p368 = por %p366, %p367
    %p370 = scmp.ne.s32.totalorder %s355, %s369
    %p371 = scmp.eq.s32.totalorder %s27, 0
    %p372 = por %p370, %p371
    %s373 = ssub.s32 %s28, %s40
    %s374 = ssub.s32 %s29, %s36
    %s375 = sor.u32 %s373, %s374
    %p376 = scmp.eq.s32.totalorder %s375, 0
    %s378 = sadd.s32 %s377, 1
    %s379 = scalar_select %p376, %s377, %s378
    %p382 = pneg %p376
    %p383 = scmp.eq.s32.totalorder %s21, 1
    %p384 = por %p382, %p383
    %p385 = scmp.ne.s32.totalorder %s377, %s380
    %p386 = scmp.eq.s32.totalorder %s21, 0
    %p387 = por %p385, %p386
    %p388 = scmp.ne.s32.totalorder %s377, %s380
    %p389 = scmp.eq.s32.totalorder %s26, 1
    %p390 = por %p388, %p389
    %p391 = scmp.ne.s32.totalorder %s380, %s381
    %p392 = scmp.eq.s32.totalorder %s26, 0
    %p393 = por %p391, %p392
    %p394 = scmp.ne.s32.totalorder %s380, %s381
    %p395 = scmp.eq.s32.totalorder %s27, 1
    %p396 = por %p394, %p395
    %p398 = scmp.ne.s32.totalorder %s381, %s397
    %p399 = scmp.eq.s32.totalorder %s27, 0
    %p400 = por %p398, %p399
    %p401 = scmp.le.s32.totalorder 1, %s21
    %p402 = scmp.lt.s32.totalorder %s21, 3
    %p403 = pnand %p401, %p402
    %p404 = pneg %p403
    // Predicated region
    $region9: #{dit_ode_block_forward.1} parent=5 // pred_check
      _
    $region10: #{dit_ode_block_forward.1} parent=5 // pred_check_branch
      %406 = sbr.rel (%p403) target = $region12
    $region11: #{dit_ode_block_forward.1} parent=5 // pred_region
      %s407 = ssub.s32 %s21, 1
      // Predicated region
      $region13: #{dit_ode_block_forward.1} parent=11 // pred_check
        %p408 = pneg %p134
      $region14: #{dit_ode_block_forward.1} parent=11 // pred_check_branch
        %410 = sbr.rel (%p408) target = $region16
      $region15: #{dit_ode_block_forward.1} parent=11 // pred_region
        _
      $region16: #{dit_ode_block_forward.1} parent=11 // pred_fallthru
        _
      // Predicated region
      $region17: #{dit_ode_block_forward.1} parent=11 // pred_check
        %p411 = pneg %p155
      $region18: #{dit_ode_block_forward.1} parent=11 // pred_check_branch
        %413 = sbr.rel (%p411) target = $region20
      $region19: #{dit_ode_block_forward.1} parent=11 // pred_region
        _
      $region20: #{dit_ode_block_forward.1} parent=11 // pred_fallthru
        _
      // Predicated region
      $region21: #{dit_ode_block_forward.1} parent=11 // pred_check
        %p414 = pneg %p176
      $region22: #{dit_ode_block_forward.1} parent=11 // pred_check_branch
        %416 = sbr.rel (%p414) target = $region24
      $region23: #{dit_ode_block_forward.1} parent=11 // pred_region
        _
      $region24: #{dit_ode_block_forward.1} parent=11 // pred_fallthru
        _
      // Predicated region
      $region25: #{dit_ode_block_forward.1} parent=11 // pred_check
        %p417 = pneg %p197
      $region26: #{dit_ode_block_forward.1} parent=11 // pred_check_branch
        %419 = sbr.rel (%p417) target = $region28
      $region27: #{dit_ode_block_forward.1} parent=11 // pred_region
        _
      $region28: #{dit_ode_block_forward.1} parent=11 // pred_fallthru
        _
      // Predicated region
      $region29: #{dit_ode_block_forward.1} parent=11 // pred_check
        %p420 = pneg %p218
      $region30: #{dit_ode_block_forward.1} parent=11 // pred_check_branch
        %422 = sbr.rel (%p420) target = $region32
      $region31: #{dit_ode_block_forward.1} parent=11 // pred_region
        _
      $region32: #{dit_ode_block_forward.1} parent=11 // pred_fallthru
        _
      // Predicated region
      $region33: #{dit_ode_block_forward.1} parent=11 // pred_check
        %p423 = pneg %p239
      $region34: #{dit_ode_block_forward.1} parent=11 // pred_check_branch
        %425 = sbr.rel (%p423) target = $region36
      $region35: #{dit_ode_block_forward.1} parent=11 // pred_region
        _
      $region36: #{dit_ode_block_forward.1} parent=11 // pred_fallthru
        _
      // Predicated region
      $region37: #{dit_ode_block_forward.1} parent=11 // pred_check
        %p426 = pneg %p260
      $region38: #{dit_ode_block_forward.1} parent=11 // pred_check_branch
        %428 = sbr.rel (%p426) target = $region40
      $region39: #{dit_ode_block_forward.1} parent=11 // pred_region
        _
      $region40: #{dit_ode_block_forward.1} parent=11 // pred_fallthru
        _
      // Predicated region
      $region41: #{dit_ode_block_forward.1} parent=11 // pred_check
        %p429 = pneg %p281
      $region42: #{dit_ode_block_forward.1} parent=11 // pred_check_branch
        %431 = sbr.rel (%p429) target = $region44
      $region43: #{dit_ode_block_forward.1} parent=11 // pred_region
        _
      $region44: #{dit_ode_block_forward.1} parent=11 // pred_fallthru
        _
      // Predicated region
      $region45: #{dit_ode_block_forward.1} parent=11 // pred_check
        %p432 = pneg %p302
      $region46: #{dit_ode_block_forward.1} parent=11 // pred_check_branch
        %434 = sbr.rel (%p432) target = $region48
      $region47: #{dit_ode_block_forward.1} parent=11 // pred_region
        _
      $region48: #{dit_ode_block_forward.1} parent=11 // pred_fallthru
        _
      // Predicated region
      $region49: #{dit_ode_block_forward.1} parent=11 // pred_check
        %p435 = pneg %p323
      $region50: #{dit_ode_block_forward.1} parent=11 // pred_check_branch
        %437 = sbr.rel (%p435) target = $region52
      $region51: #{dit_ode_block_forward.1} parent=11 // pred_region
        _
      $region52: #{dit_ode_block_forward.1} parent=11 // pred_fallthru
        _
      // Predicated region
      $region53: #{dit_ode_block_forward.1} parent=11 // pred_check
        %p438 = pneg %p344
      $region54: #{dit_ode_block_forward.1} parent=11 // pred_check_branch
        %440 = sbr.rel (%p438) target = $region56
      $region55: #{dit_ode_block_forward.1} parent=11 // pred_region
        _
      $region56: #{dit_ode_block_forward.1} parent=11 // pred_fallthru
        _
      // Predicated region
      $region57: #{dit_ode_block_forward.1} parent=11 // pred_check
        %p441 = pneg %p365
      $region58: #{dit_ode_block_forward.1} parent=11 // pred_check_branch
        %443 = sbr.rel (%p441) target = $region60
      $region59: #{dit_ode_block_forward.1} parent=11 // pred_region
        _
      $region60: #{dit_ode_block_forward.1} parent=11 // pred_fallthru
        _
    $region12: #{dit_ode_block_forward.1} parent=5 // pred_fallthru
      _
    %p444 = scmp.lt.s32.totalorder %s21, 2
    // Predicated region
    $region61: #{dit_ode_block_forward.1} parent=5 // pred_check
      %p445 = pneg %p444
    $region62: #{dit_ode_block_forward.1} parent=5 // pred_check_branch
      %447 = sbr.rel (%p445) target = $region64
    $region63: #{dit_ode_block_forward.1} parent=5 // pred_region
      // Predicated region
      $region65: #{dit_ode_block_forward.1} parent=63 // pred_check
        %p448 = pneg %p55
      $region66: #{dit_ode_block_forward.1} parent=63 // pred_check_branch
        %450 = sbr.rel (%p448) target = $region68
      $region67: #{dit_ode_block_forward.1} parent=63 // pred_region
        %p451 = scmp.lt.s32.totalorder %s28, 1
        %s452 = scalar_select %p451, %s28, 1
        %p453 = scmp.lt.s32.totalorder %s29, 0
        %s454 = scalar_select %p453, %s29, 0
        %s455 = sadd.s32 %s454, %s452
        %s456 = smul.addr %s455, 8
        %s457 = scalar_lea.vmem %s0, %s456
      $region68: #{dit_ode_block_forward.1} parent=63 // pred_fallthru
        _
      // Predicated region
      $region69: #{dit_ode_block_forward.1} parent=63 // pred_check
        %p458 = pneg %p81
      $region70: #{dit_ode_block_forward.1} parent=63 // pred_check_branch
        %460 = sbr.rel (%p458) target = $region72
      $region71: #{dit_ode_block_forward.1} parent=63 // pred_region
        %p461 = scmp.lt.s32.totalorder %s28, 1
        %s462 = scalar_select %p461, %s28, 1
        %s463 = smul.addr %s462, 8
        %s464 = scalar_lea.vmem %s1, %s463
      $region72: #{dit_ode_block_forward.1} parent=63 // pred_fallthru
        _
      // Predicated region
      $region73: #{dit_ode_block_forward.1} parent=63 // pred_check
        %p465 = pneg %p107
      $region74: #{dit_ode_block_forward.1} parent=63 // pred_check_branch
        %467 = sbr.rel (%p465) target = $region76
      $region75: #{dit_ode_block_forward.1} parent=63 // pred_region
        %p468 = scmp.lt.s32.totalorder %s28, 1
        %s469 = scalar_select %p468, %s28, 1
        %s470 = smul.addr %s469, 8
        %s471 = scalar_lea.vmem %s2, %s470
      $region76: #{dit_ode_block_forward.1} parent=63 // pred_fallthru
        _
    $region64: #{dit_ode_block_forward.1} parent=5 // pred_fallthru
      _
    %p472 = scmp.le.s32.totalorder 1, %s21
    %p473 = scmp.lt.s32.totalorder %s21, 3
    %p474 = pnand %p472, %p473
    %p475 = pneg %p474
    // Predicated region
    $region77: #{dit_ode_block_forward.1} parent=5 // pred_check
      _
    $region78: #{dit_ode_block_forward.1} parent=5 // pred_check_branch
      %477 = sbr.rel (%p474) target = $region80
    $region79: #{dit_ode_block_forward.1} parent=5 // pred_region
      %s478 = ssub.s32 %s21, 1
      %p479 = scmp.lt.s32.totalorder %s30, 1
      %s480 = scalar_select %p479, %s30, 1
      %p481 = scmp.lt.s32.totalorder %s31, 0
      %s482 = scalar_select %p481, %s31, 0
      %s483 = sadd.s32 %s482, %s480
      %s484 = smul.addr %s483, 8
      %s485 = scalar_lea.vmem %s0, %s484
      %p486 = pneg %p61
      %p487 = pneg %p58
      %p488 = scmp.lt.s32.totalorder %s30, 1
      %s489 = scalar_select %p488, %s30, 1
      %s490 = smul.addr %s489, 8
      %s491 = scalar_lea.vmem %s1, %s490
      %p492 = pneg %p87
      %p493 = pneg %p84
      %p494 = scmp.lt.s32.totalorder %s30, 1
      %s495 = scalar_select %p494, %s30, 1
      %s496 = smul.addr %s495, 8
      %s497 = scalar_lea.vmem %s2, %s496
      %p498 = pneg %p113
      %p499 = pneg %p110
      %p500 = pneg %p134
      %p501 = pneg %p131
      %p502 = pneg %p155
      %p503 = pneg %p152
      %p504 = pneg %p176
      %p505 = pneg %p173
      %p506 = pneg %p197
      %p507 = pneg %p194
      %p508 = pneg %p218
      %p509 = pneg %p215
      %p510 = pneg %p239
      %p511 = pneg %p236
      %p512 = pneg %p260
      %p513 = pneg %p257
      %p514 = pneg %p281
      %p515 = pneg %p278
      %p516 = pneg %p302
      %p517 = pneg %p299
      %p518 = pneg %p323
      %p519 = pneg %p320
      %p520 = pneg %p344
      %p521 = pneg %p341
      %p522 = pneg %p365
      %p523 = pneg %p362
      %p524 = pneg %p393
      %p525 = pneg %p390
      %p526 = scmp.lt.s32.totalorder %s30, 1
      %s527 = scalar_select %p526, %s30, 1
      %p528 = scmp.lt.s32.totalorder %s31, 0
      %s529 = scalar_select %p528, %s31, 0
      %s530 = sadd.s32 %s529, %s527
      %s531 = smul.addr %s530, 8
      %s532 = scalar_lea.vmem %s15, %s531
      %p533 = scmp.lt.s32.totalorder %s30, 1
      %s534 = scalar_select %p533, %s30, 1
      %p535 = scmp.lt.s32.totalorder %s31, 0
      %s536 = scalar_select %p535, %s31, 0
      %s537 = sadd.s32 %s536, %s534
      %s538 = smul.addr %s537, 8
      %s539 = scalar_lea.vmem %s0, %s538
      %p540 = scmp.lt.s32.totalorder %s30, 1
      %s541 = scalar_select %p540, %s30, 1
      %s542 = smul.addr %s541, 8
      %s543 = scalar_lea.vmem %s1, %s542
      %p544 = scmp.lt.s32.totalorder %s30, 1
      %s545 = scalar_select %p544, %s30, 1
      %s546 = smul.addr %s545, 8
      %s547 = scalar_lea.vmem %s2, %s546
      %p548 = scmp.lt.s32.totalorder %s30, 1
      %s549 = scalar_select %p548, %s30, 1
      %p550 = scmp.lt.s32.totalorder %s31, 0
      %s551 = scalar_select %p550, %s31, 0
      %s552 = sadd.s32 %s551, %s549
      %s553 = smul.addr %s552, 8
      %s554 = scalar_lea.vmem %s15, %s553
      %v556 = vld [vmem:[%s539] sm:$0xff]
      %v557 = vld [vmem:[%s543] sm:$0xff]
      %v558 = vld [vmem:[%s547] sm:$0x3f]
      %vm559 = vcmask 261120
      %v560 = vsel %vm559, %v556, 0.0
      %561 = vadd.xlane.f32.xlu0 %v560
      %v562 = vpop.xlane.xlu0 %561
      %v563 = vrcp.pop 32.0
      %v564 = vmul.f32 %v562, %v563
      %v565 = vmul.f32 %v556, %v556
      %v566 = vsel %vm559, %v565, 0.0
      %567 = vadd.xlane.f32.xlu0 %v566
      %v568 = vpop.xlane.xlu0 %567
      %v569 = vmul.f32 %v568, %v563
      %v570 = vmul.f32 %v564, %v564
      %v571 = vsub.f32 %v569, %v570
      %v572 = vsub.f32 %v556, %v564
      %v573 = vadd.f32 %v571, 1e-06
      %v574 = vrsqrt.pop %v573
      %v575 = vmul.f32 %v572, %v574
      %v576 = vadd.f32 %v558, 1.0
      %v577 = vlaneseq
      %v578 = vshrl.u32 %v577, 7
      %v579 = vsub.s32 1, %v578
      %v580 = vrot.slane %v576, %v579
      %v581 = vmul.f32 %v575, %v580
      %v582 = vlaneseq
      %v583 = vshrl.u32 %v582, 7
      %v584 = vsub.s32 0, %v583
      %v585 = vrot.slane %v558, %v584
      %v586 = vadd.f32 %v581, %v585
      %v587 = vsel %vm559, %v557, 0.0
      %588 = vadd.xlane.f32.xlu0 %v587
      %v589 = vpop.xlane.xlu0 %588
      %v590 = vmul.f32 %v589, %v563
      %v591 = vmul.f32 %v557, %v557
      %v592 = vsel %vm559, %v591, 0.0
      %593 = vadd.xlane.f32.xlu0 %v592
      %v594 = vpop.xlane.xlu0 %593
      %v595 = vmul.f32 %v594, %v563
      %v596 = vmul.f32 %v590, %v590
      %v597 = vsub.f32 %v595, %v596
      %v598 = vsub.f32 %v557, %v590
      %v599 = vadd.f32 %v597, 1e-06
      %v600 = vrsqrt.pop %v599
      %v601 = vmul.f32 %v598, %v600
      %v602 = vmul.f32 %v601, %v580
      %v603 = vadd.f32 %v602, %v585
      %v604 = vpack.c.bf16 %v586, %v586
      %v605 = vld [vmem:[%s3] sm:$0xf]
      %v606 = vld [vmem:[%s3 + $0x4] sm:$0xf]
      %v607 = vld [vmem:[%s3 + $0x8] sm:$0xf]
      %v608 = vld [vmem:[%s3 + $0xc] sm:$0xf]
      %v609 = vld [vmem:[%s4] sm:$0x1]
      %v611 = vlaneseq
      %v612 = vshrl.u32 %v611, 7
      %v613 = vsub.s32 0, %v612
      %v614 = vrot.slane %v609, %v613
      %v620 = vunpack.c.l.b16 %v605
      %v621 = vunpack.c.l.b16 %v606
      %v622 = vunpack.c.l.b16 %v607
      %v623 = vunpack.c.l.b16 %v608
      %v624 = vpack.c.b16 %v621, %v620
      %v625 = vpack.c.b16 %v623, %v622
      %v629 = vsel %vm559, %v604, 0
      %631 = vmatprep.subr.bf16.mxu0 0
      %632 = vmatpush1.bf16.msra.mxu0 %v624
      %633 = vmatprep.subr.bf16.mxu0 0
      %634 = vmatpush1.bf16.msra.mxu0 %v625
      %635 = vmatprep.subr.bf16.mxu0 0
      %636 = vmatpush1.bf16.msra.mxu0 0
      %637 = vmatprep.subr.bf16.mxu0 0
      %638 = vmatpush1.bf16.msra.mxu0 0
      %639 = vmatprep.subr.bf16.mxu0 0
      %640 = vmatpush1.bf16.msra.mxu0 0
      %641 = vmatprep.subr.bf16.mxu0 0
      %642 = vmatpush1.bf16.msra.mxu0 0
      %643 = vmatprep.subr.bf16.mxu0 0
      %644 = vmatpush1.bf16.msra.mxu0 0
      %645 = vmatprep.subr.bf16.mxu0 0
      %646 = vmatpush1.bf16.msra.mxu0 0
      %647 = vmatprep.subr.bf16.mxu0 0
      %648 = vmatpush1.bf16.msra.mxu0 0
      %649 = vmatprep.subr.bf16.mxu0 0
      %650 = vmatpush1.bf16.msra.mxu0 0
      %651 = vmatprep.subr.bf16.mxu0 0
      %652 = vmatpush1.bf16.msra.mxu0 0
      %653 = vmatprep.subr.bf16.mxu0 0
      %654 = vmatpush1.bf16.msra.mxu0 0
      %655 = vmatprep.subr.bf16.mxu0 0
      %656 = vmatpush1.bf16.msra.mxu0 0
      %657 = vmatprep.subr.bf16.mxu0 0
      %658 = vmatpush1.bf16.msra.mxu0 0
      %659 = vmatprep.subr.bf16.mxu0 0
      %660 = vmatpush1.bf16.msra.mxu0 0
      %661 = vmatprep.subr.bf16.mxu0 0
      %662 = vmatpush1.bf16.msra.mxu0 0
      %663 = vmatprep.mubr.bf16.mxu0 0
      %664 = vmatmul.mubr.bf16.gmra.mrb[0].mxu0 %v629
      %v665 = vpop.f32.mrb[0].mxu0
      %v666 = vadd.f32 %v614, %v665
      %v667 = vpop.f32.mrb[0].mxu0
      %v668 = vpop.f32.mrb[0].mxu0
      %v669 = vpop.f32.mrb[0].mxu0
      %670 = vdwg.mxu0
      %v671 = vpack.c.bf16 %v603, %v603
      %v672 = vld [vmem:[%s5] sm:$0xf]
      %v673 = vld [vmem:[%s5 + $0x4] sm:$0xf]
      %v674 = vld [vmem:[%s5 + $0x8] sm:$0xf]
      %v675 = vld [vmem:[%s5 + $0xc] sm:$0xf]
      %v676 = vld [vmem:[%s6] sm:$0x1]
      %v678 = vlaneseq
      %v679 = vshrl.u32 %v678, 7
      %v680 = vsub.s32 0, %v679
      %v681 = vrot.slane %v676, %v680
      %v687 = vunpack.c.l.b16 %v672
      %v688 = vunpack.c.l.b16 %v673
      %v689 = vunpack.c.l.b16 %v674
      %v690 = vunpack.c.l.b16 %v675
      %v691 = vpack.c.b16 %v688, %v687
      %v692 = vpack.c.b16 %v690, %v689
      %v696 = vsel %vm559, %v671, 0
      %698 = vmatprep.subr.bf16.mxu0 0
      %699 = vmatpush1.bf16.msra.mxu0 %v691
      %700 = vmatprep.subr.bf16.mxu0 0
      %701 = vmatpush1.bf16.msra.mxu0 %v692
      %702 = vmatprep.subr.bf16.mxu0 0
      %703 = vmatpush1.bf16.msra.mxu0 0
      %704 = vmatprep.subr.bf16.mxu0 0
      %705 = vmatpush1.bf16.msra.mxu0 0
      %706 = vmatprep.subr.bf16.mxu0 0
      %707 = vmatpush1.bf16.msra.mxu0 0
      %708 = vmatprep.subr.bf16.mxu0 0
      %709 = vmatpush1.bf16.msra.mxu0 0
      %710 = vmatprep.subr.bf16.mxu0 0
      %711 = vmatpush1.bf16.msra.mxu0 0
      %712 = vmatprep.subr.bf16.mxu0 0
      %713 = vmatpush1.bf16.msra.mxu0 0
      %714 = vmatprep.subr.bf16.mxu0 0
      %715 = vmatpush1.bf16.msra.mxu0 0
      %716 = vmatprep.subr.bf16.mxu0 0
      %717 = vmatpush1.bf16.msra.mxu0 0
      %718 = vmatprep.subr.bf16.mxu0 0
      %719 = vmatpush1.bf16.msra.mxu0 0
      %720 = vmatprep.subr.bf16.mxu0 0
      %721 = vmatpush1.bf16.msra.mxu0 0
      %722 = vmatprep.subr.bf16.mxu0 0
      %723 = vmatpush1.bf16.msra.mxu0 0
      %724 = vmatprep.subr.bf16.mxu0 0
      %725 = vmatpush1.bf16.msra.mxu0 0
      %726 = vmatprep.subr.bf16.mxu0 0
      %727 = vmatpush1.bf16.msra.mxu0 0
      %728 = vmatprep.subr.bf16.mxu0 0
      %729 = vmatpush1.bf16.msra.mxu0 0
      %730 = vmatprep.mubr.bf16.mxu0 0
      %731 = vmatmul.mubr.bf16.gmra.mrb[0].mxu0 %v696
      %v732 = vpop.f32.mrb[0].mxu0
      %v733 = vadd.f32 %v681, %v732
      %v734 = vpop.f32.mrb[0].mxu0
      %v735 = vpop.f32.mrb[0].mxu0
      %v736 = vpop.f32.mrb[0].mxu0
      %737 = vdwg.mxu0
      %v738 = vld [vmem:[%s7] sm:$0xf]
      %v739 = vld [vmem:[%s7 + $0x4] sm:$0xf]
      %v740 = vld [vmem:[%s7 + $0x8] sm:$0xf]
      %v741 = vld [vmem:[%s7 + $0xc] sm:$0xf]
      %v742 = vld [vmem:[%s8] sm:$0x1]
      %v744 = vlaneseq
      %v745 = vshrl.u32 %v744, 7
      %v746 = vsub.s32 0, %v745
      %v747 = vrot.slane %v742, %v746
      %v753 = vunpack.c.l.b16 %v738
      %v754 = vunpack.c.l.b16 %v739
      %v755 = vunpack.c.l.b16 %v740
      %v756 = vunpack.c.l.b16 %v741
      %v757 = vpack.c.b16 %v754, %v753
      %v758 = vpack.c.b16 %v756, %v755
      %761 = vmatprep.subr.bf16.mxu0 0
      %762 = vmatpush1.bf16.msra.mxu0 %v757
      %763 = vmatprep.subr.bf16.mxu0 0
      %764 = vmatpush1.bf16.msra.mxu0 %v758
      %765 = vmatprep.subr.bf16.mxu0 0
      %766 = vmatpush1.bf16.msra.mxu0 0
      %767 = vmatprep.subr.bf16.mxu0 0
      %768 = vmatpush1.bf16.msra.mxu0 0
      %769 = vmatprep.subr.bf16.mxu0 0
      %770 = vmatpush1.bf16.msra.mxu0 0
      %771 = vmatprep.subr.bf16.mxu0 0
      %772 = vmatpush1.bf16.msra.mxu0 0
      %773 = vmatprep.subr.bf16.mxu0 0
      %774 = vmatpush1.bf16.msra.mxu0 0
      %775 = vmatprep.subr.bf16.mxu0 0
      %776 = vmatpush1.bf16.msra.mxu0 0
      %777 = vmatprep.subr.bf16.mxu0 0
      %778 = vmatpush1.bf16.msra.mxu0 0
      %779 = vmatprep.subr.bf16.mxu0 0
      %780 = vmatpush1.bf16.msra.mxu0 0
      %781 = vmatprep.subr.bf16.mxu0 0
      %782 = vmatpush1.bf16.msra.mxu0 0
      %783 = vmatprep.subr.bf16.mxu0 0
      %784 = vmatpush1.bf16.msra.mxu0 0
      %785 = vmatprep.subr.bf16.mxu0 0
      %786 = vmatpush1.bf16.msra.mxu0 0
      %787 = vmatprep.subr.bf16.mxu0 0
      %788 = vmatpush1.bf16.msra.mxu0 0
      %789 = vmatprep.subr.bf16.mxu0 0
      %790 = vmatpush1.bf16.msra.mxu0 0
      %791 = vmatprep.subr.bf16.mxu0 0
      %792 = vmatpush1.bf16.msra.mxu0 0
      %793 = vmatprep.mubr.bf16.mxu0 0
      %794 = vmatmul.mubr.bf16.gmra.mrb[0].mxu0 %v696
      %v795 = vpop.f32.mrb[0].mxu0
      %v796 = vadd.f32 %v747, %v795
      %v797 = vpop.f32.mrb[0].mxu0
      %v798 = vpop.f32.mrb[0].mxu0
      %v799 = vpop.f32.mrb[0].mxu0
      %800 = vdwg.mxu0
      %802 = vrot.lane.b32.xlu0 %v666, 120
      %v803 = vpop.permute.xlu0 %802
      %805 = vrot.lane.b32.xlu0 %v666, 112
      %v806 = vpop.permute.xlu0 %805
      %808 = vrot.lane.b32.xlu0 %v666, 104
      %v809 = vpop.permute.xlu0 %808
      %812 = vrot.lane.b32.xlu0 %v733, 120
      %v813 = vpop.permute.xlu0 %812
      %815 = vrot.lane.b32.xlu0 %v733, 112
      %v816 = vpop.permute.xlu0 %815
      %818 = vrot.lane.b32.xlu0 %v733, 104
      %v819 = vpop.permute.xlu0 %818
      %822 = vrot.lane.b32.xlu0 %v796, 120
      %v823 = vpop.permute.xlu0 %822
      %825 = vrot.lane.b32.xlu0 %v796, 112
      %v826 = vpop.permute.xlu0 %825
      %828 = vrot.lane.b32.xlu0 %v796, 104
      %v829 = vpop.permute.xlu0 %828
      %v831 = vpack.c.bf16 %v666, %v666
      %v832 = vpack.c.bf16 %v803, %v803
      %v833 = vpack.c.bf16 %v806, %v806
      %v834 = vpack.c.bf16 %v809, %v809
      %v835 = vpack.c.bf16 %v733, %v733
      %v836 = vpack.c.bf16 %v813, %v813
      %v837 = vpack.c.bf16 %v816, %v816
      %v838 = vpack.c.bf16 %v819, %v819
      %vm839 = vcmask 64512
      %v841 = vsel %vm839, %v831, 0
      %v844 = vsel %vm839, %v835, 0
      %846 = vmatprep.subr.bf16.mxu0 0
      %847 = vmatpush1.bf16.xpose.msra.mxu0 %v844
      %848 = vmatprep.subr.bf16.mxu0 0
      %849 = vmatpush1.bf16.xpose.msra.mxu0 0
      %850 = vmatprep.subr.bf16.mxu0 0
      %851 = vmatpush1.bf16.xpose.msra.mxu0 0
      %852 = vmatprep.subr.bf16.mxu0 0
      %853 = vmatpush1.bf16.xpose.msra.mxu0 0
      %854 = vmatprep.subr.bf16.mxu0 0
      %855 = vmatpush1.bf16.xpose.msra.mxu0 0
      %856 = vmatprep.subr.bf16.mxu0 0
      %857 = vmatpush1.bf16.xpose.msra.mxu0 0
      %858 = vmatprep.subr.bf16.mxu0 0
      %859 = vmatpush1.bf16.xpose.msra.mxu0 0
      %860 = vmatprep.subr.bf16.mxu0 0
      %861 = vmatpush1.bf16.xpose.msra.mxu0 0
      %862 = vmatprep.subr.bf16.mxu0 0
      %863 = vmatpush1.bf16.xpose.msra.mxu0 0
      %864 = vmatprep.subr.bf16.mxu0 0
      %865 = vmatpush1.bf16.xpose.msra.mxu0 0
      %866 = vmatprep.subr.bf16.mxu0 0
      %867 = vmatpush1.bf16.xpose.msra.mxu0 0
      %868 = vmatprep.subr.bf16.mxu0 0
      %869 = vmatpush1.bf16.xpose.msra.mxu0 0
      %870 = vmatprep.subr.bf16.mxu0 0
      %871 = vmatpush1.bf16.xpose.msra.mxu0 0
      %872 = vmatprep.subr.bf16.mxu0 0
      %873 = vmatpush1.bf16.xpose.msra.mxu0 0
      %874 = vmatprep.subr.bf16.mxu0 0
      %875 = vmatpush1.bf16.xpose.msra.mxu0 0
      %876 = vmatprep.subr.bf16.mxu0 0
      %877 = vmatpush1.bf16.xpose.msra.mxu0 0
      %878 = vmatprep.mubr.bf16.mxu0 0
      %879 = vmatmul.mubr.bf16.gmra.mrb[0].mxu0 %v841
      %v880 = vpop.f32.mrb[0].mxu0
      %v881 = vadd.f32 0.0, %v880
      %v882 = vpop.f32.mrb[0].mxu0
      %v883 = vpop.f32.mrb[0].mxu0
      %v884 = vpop.f32.mrb[0].mxu0
      %885 = vdwg.mxu0
      %v887 = vsel %vm839, %v832, 0
      %v890 = vsel %vm839, %v836, 0
      %892 = vmatprep.subr.bf16.mxu0 0
      %893 = vmatpush1.bf16.xpose.msra.mxu0 %v890
      %894 = vmatprep.subr.bf16.mxu0 0
      %895 = vmatpush1.bf16.xpose.msra.mxu0 0
      %896 = vmatprep.subr.bf16.mxu0 0
      %897 = vmatpush1.bf16.xpose.msra.mxu0 0
      %898 = vmatprep.subr.bf16.mxu0 0
      %899 = vmatpush1.bf16.xpose.msra.mxu0 0
      %900 = vmatprep.subr.bf16.mxu0 0
      %901 = vmatpush1.bf16.xpose.msra.mxu0 0
      %902 = vmatprep.subr.bf16.mxu0 0
      %903 = vmatpush1.bf16.xpose.msra.mxu0 0
      %904 = vmatprep.subr.bf16.mxu0 0
      %905 = vmatpush1.bf16.xpose.msra.mxu0 0
      %906 = vmatprep.subr.bf16.mxu0 0
      %907 = vmatpush1.bf16.xpose.msra.mxu0 0
      %908 = vmatprep.subr.bf16.mxu0 0
      %909 = vmatpush1.bf16.xpose.msra.mxu0 0
      %910 = vmatprep.subr.bf16.mxu0 0
      %911 = vmatpush1.bf16.xpose.msra.mxu0 0
      %912 = vmatprep.subr.bf16.mxu0 0
      %913 = vmatpush1.bf16.xpose.msra.mxu0 0
      %914 = vmatprep.subr.bf16.mxu0 0
      %915 = vmatpush1.bf16.xpose.msra.mxu0 0
      %916 = vmatprep.subr.bf16.mxu0 0
      %917 = vmatpush1.bf16.xpose.msra.mxu0 0
      %918 = vmatprep.subr.bf16.mxu0 0
      %919 = vmatpush1.bf16.xpose.msra.mxu0 0
      %920 = vmatprep.subr.bf16.mxu0 0
      %921 = vmatpush1.bf16.xpose.msra.mxu0 0
      %922 = vmatprep.subr.bf16.mxu0 0
      %923 = vmatpush1.bf16.xpose.msra.mxu0 0
      %924 = vmatprep.mubr.bf16.mxu0 0
      %925 = vmatmul.mubr.bf16.gmra.mrb[0].mxu0 %v887
      %v926 = vpop.f32.mrb[0].mxu0
      %v927 = vadd.f32 0.0, %v926
      %v928 = vpop.f32.mrb[0].mxu0
      %v929 = vpop.f32.mrb[0].mxu0
      %v930 = vpop.f32.mrb[0].mxu0
      %931 = vdwg.mxu0
      %v933 = vsel %vm839, %v833, 0
      %v936 = vsel %vm839, %v837, 0
      %938 = vmatprep.subr.bf16.mxu0 0
      %939 = vmatpush1.bf16.xpose.msra.mxu0 %v936
      %940 = vmatprep.subr.bf16.mxu0 0
      %941 = vmatpush1.bf16.xpose.msra.mxu0 0
      %942 = vmatprep.subr.bf16.mxu0 0
      %943 = vmatpush1.bf16.xpose.msra.mxu0 0
      %944 = vmatprep.subr.bf16.mxu0 0
      %945 = vmatpush1.bf16.xpose.msra.mxu0 0
      %946 = vmatprep.subr.bf16.mxu0 0
      %947 = vmatpush1.bf16.xpose.msra.mxu0 0
      %948 = vmatprep.subr.bf16.mxu0 0
      %949 = vmatpush1.bf16.xpose.msra.mxu0 0
      %950 = vmatprep.subr.bf16.mxu0 0
      %951 = vmatpush1.bf16.xpose.msra.mxu0 0
      %952 = vmatprep.subr.bf16.mxu0 0
      %953 = vmatpush1.bf16.xpose.msra.mxu0 0
      %954 = vmatprep.subr.bf16.mxu0 0
      %955 = vmatpush1.bf16.xpose.msra.mxu0 0
      %956 = vmatprep.subr.bf16.mxu0 0
      %957 = vmatpush1.bf16.xpose.msra.mxu0 0
      %958 = vmatprep.subr.bf16.mxu0 0
      %959 = vmatpush1.bf16.xpose.msra.mxu0 0
      %960 = vmatprep.subr.bf16.mxu0 0
      %961 = vmatpush1.bf16.xpose.msra.mxu0 0
      %962 = vmatprep.subr.bf16.mxu0 0
      %963 = vmatpush1.bf16.xpose.msra.mxu0 0
      %964 = vmatprep.subr.bf16.mxu0 0
      %965 = vmatpush1.bf16.xpose.msra.mxu0 0
      %966 = vmatprep.subr.bf16.mxu0 0
      %967 = vmatpush1.bf16.xpose.msra.mxu0 0
      %968 = vmatprep.subr.bf16.mxu0 0
      %969 = vmatpush1.bf16.xpose.msra.mxu0 0
      %970 = vmatprep.mubr.bf16.mxu0 0
      %971 = vmatmul.mubr.bf16.gmra.mrb[0].mxu0 %v933
      %v972 = vpop.f32.mrb[0].mxu0
      %v973 = vadd.f32 0.0, %v972
      %v974 = vpop.f32.mrb[0].mxu0
      %v975 = vpop.f32.mrb[0].mxu0
      %v976 = vpop.f32.mrb[0].mxu0
      %977 = vdwg.mxu0
      %v979 = vsel %vm839, %v834, 0
      %v982 = vsel %vm839, %v838, 0
      %984 = vmatprep.subr.bf16.mxu0 0
      %985 = vmatpush1.bf16.xpose.msra.mxu0 %v982
      %986 = vmatprep.subr.bf16.mxu0 0
      %987 = vmatpush1.bf16.xpose.msra.mxu0 0
      %988 = vmatprep.subr.bf16.mxu0 0
      %989 = vmatpush1.bf16.xpose.msra.mxu0 0
      %990 = vmatprep.subr.bf16.mxu0 0
      %991 = vmatpush1.bf16.xpose.msra.mxu0 0
      %992 = vmatprep.subr.bf16.mxu0 0
      %993 = vmatpush1.bf16.xpose.msra.mxu0 0
      %994 = vmatprep.subr.bf16.mxu0 0
      %995 = vmatpush1.bf16.xpose.msra.mxu0 0
      %996 = vmatprep.subr.bf16.mxu0 0
      %997 = vmatpush1.bf16.xpose.msra.mxu0 0
      %998 = vmatprep.subr.bf16.mxu0 0
      %999 = vmatpush1.bf16.xpose.msra.mxu0 0
      %1000 = vmatprep.subr.bf16.mxu0 0
      %1001 = vmatpush1.bf16.xpose.msra.mxu0 0
      %1002 = vmatprep.subr.bf16.mxu0 0
      %1003 = vmatpush1.bf16.xpose.msra.mxu0 0
      %1004 = vmatprep.subr.bf16.mxu0 0
      %1005 = vmatpush1.bf16.xpose.msra.mxu0 0
      %1006 = vmatprep.subr.bf16.mxu0 0
      %1007 = vmatpush1.bf16.xpose.msra.mxu0 0
      %1008 = vmatprep.subr.bf16.mxu0 0
      %1009 = vmatpush1.bf16.xpose.msra.mxu0 0
      %1010 = vmatprep.subr.bf16.mxu0 0
      %1011 = vmatpush1.bf16.xpose.msra.mxu0 0
      %1012 = vmatprep.subr.bf16.mxu0 0
      %1013 = vmatpush1.bf16.xpose.msra.mxu0 0
      %1014 = vmatprep.subr.bf16.mxu0 0
      %1015 = vmatpush1.bf16.xpose.msra.mxu0 0
      %1016 = vmatprep.mubr.bf16.mxu0 0
      %1017 = vmatmul.mubr.bf16.gmra.mrb[0].mxu0 %v979
      %v1018 = vpop.f32.mrb[0].mxu0
      %v1019 = vadd.f32 0.0, %v1018
      %v1020 = vpop.f32.mrb[0].mxu0
      %v1021 = vpop.f32.mrb[0].mxu0
      %v1022 = vpop.f32.mrb[0].mxu0
      %1023 = vdwg.mxu0
      %v1024 = vmul.f32 %v881, 0.35355338
      %v1025 = vmul.f32 %v927, 0.35355338
      %v1026 = vmul.f32 %v973, 0.35355338
      %v1027 = vmul.f32 %v1019, 0.35355338
      %v1028 = vsel %vm839, %v1024, -inf
      %1029 = vmax.xlane.f32.xlu0 %v1028
      %v1030 = vpop.xlane.xlu0 %1029
      %v1031 = vsel %vm839, %v1025, -inf
      %1032 = vmax.xlane.f32.xlu0 %v1031
      %v1033 = vpop.xlane.xlu0 %1032
      %v1034 = vsel %vm839, %v1026, -inf
      %1035 = vmax.xlane.f32.xlu0 %v1034
      %v1036 = vpop.xlane.xlu0 %1035
      %v1037 = vsel %vm839, %v1027, -inf
      %1038 = vmax.xlane.f32.xlu0 %v1037
      %v1039 = vpop.xlane.xlu0 %1038
      %v1040 = vsub.f32 %v1024, %v1030
      %v1041 = vsub.f32 %v1025, %v1033
      %v1042 = vsub.f32 %v1026, %v1036
      %v1043 = vsub.f32 %v1027, %v1039
      %v1044 = vmul.f32 %v1040, 1.442695
      %v1045 = vpow.pop %v1044
      %v1046 = vmul.f32 %v1041, 1.442695
      %v1047 = vpow.pop %v1046
      %v1048 = vmul.f32 %v1042, 1.442695
      %v1049 = vpow.pop %v1048
      %v1050 = vmul.f32 %v1043, 1.442695
      %v1051 = vpow.pop %v1050
      %v1052 = vsel %vm839, %v1045, 0.0
      %1053 = vadd.xlane.f32.xlu0 %v1052
      %v1054 = vpop.xlane.xlu0 %1053
      %v1055 = vsel %vm839, %v1047, 0.0
      %1056 = vadd.xlane.f32.xlu0 %v1055
      %v1057 = vpop.xlane.xlu0 %1056
      %v1058 = vsel %vm839, %v1049, 0.0
      %1059 = vadd.xlane.f32.xlu0 %v1058
      %v1060 = vpop.xlane.xlu0 %1059
      %v1061 = vsel %vm839, %v1051, 0.0
      %1062 = vadd.xlane.f32.xlu0 %v1061
      %v1063 = vpop.xlane.xlu0 %1062
      %v1064 = vpack.c.bf16 %v1045, %v1045
      %v1065 = vpack.c.bf16 %v1047, %v1047
      %v1066 = vpack.c.bf16 %v1049, %v1049
      %v1067 = vpack.c.bf16 %v1051, %v1051
      %v1068 = vpack.c.bf16 %v796, %v796
      %v1069 = vpack.c.bf16 %v823, %v823
      %v1070 = vpack.c.bf16 %v826, %v826
      %v1071 = vpack.c.bf16 %v829, %v829
      %v1073 = vsel %vm839, %v1064, 0
      %vm1075 = vcmask 1043456
      %v1077 = vsel %vm1075, %v1068, 0
      %1079 = vmatprep.subr.bf16.mxu0 0
      %1080 = vmatpush1.bf16.msra.mxu0 %v1077
      %1081 = vmatprep.subr.bf16.mxu0 0
      %1082 = vmatpush1.bf16.msra.mxu0 0
      %1083 = vmatprep.subr.bf16.mxu0 0
      %1084 = vmatpush1.bf16.msra.mxu0 0
      %1085 = vmatprep.subr.bf16.mxu0 0
      %1086 = vmatpush1.bf16.msra.mxu0 0
      %1087 = vmatprep.subr.bf16.mxu0 0
      %1088 = vmatpush1.bf16.msra.mxu0 0
      %1089 = vmatprep.subr.bf16.mxu0 0
      %1090 = vmatpush1.bf16.msra.mxu0 0
      %1091 = vmatprep.subr.bf16.mxu0 0
      %1092 = vmatpush1.bf16.msra.mxu0 0
      %1093 = vmatprep.subr.bf16.mxu0 0
      %1094 = vmatpush1.bf16.msra.mxu0 0
      %1095 = vmatprep.subr.bf16.mxu0 0
      %1096 = vmatpush1.bf16.msra.mxu0 0
      %1097 = vmatprep.subr.bf16.mxu0 0
      %1098 = vmatpush1.bf16.msra.mxu0 0
      %1099 = vmatprep.subr.bf16.mxu0 0
      %1100 = vmatpush1.bf16.msra.mxu0 0
      %1101 = vmatprep.subr.bf16.mxu0 0
      %1102 = vmatpush1.bf16.msra.mxu0 0
      %1103 = vmatprep.subr.bf16.mxu0 0
      %1104 = vmatpush1.bf16.msra.mxu0 0
      %1105 = vmatprep.subr.bf16.mxu0 0
      %1106 = vmatpush1.bf16.msra.mxu0 0
      %1107 = vmatprep.subr.bf16.mxu0 0
      %1108 = vmatpush1.bf16.msra.mxu0 0
      %1109 = vmatprep.subr.bf16.mxu0 0
      %1110 = vmatpush1.bf16.msra.mxu0 0
      %1111 = vmatprep.mubr.bf16.mxu0 0
      %1112 = vmatmul.mubr.bf16.gmra.mrb[0].mxu0 %v1073
      %v1113 = vpop.f32.mrb[0].mxu0
      %v1114 = vadd.f32 0.0, %v1113
      %v1115 = vpop.f32.mrb[0].mxu0
      %v1116 = vpop.f32.mrb[0].mxu0
      %v1117 = vpop.f32.mrb[0].mxu0
      %1118 = vdwg.mxu0
      %v1120 = vsel %vm839, %v1065, 0
      %v1123 = vsel %vm1075, %v1069, 0
      %1125 = vmatprep.subr.bf16.mxu0 0
      %1126 = vmatpush1.bf16.msra.mxu0 %v1123
      %1127 = vmatprep.subr.bf16.mxu0 0
      %1128 = vmatpush1.bf16.msra.mxu0 0
      %1129 = vmatprep.subr.bf16.mxu0 0
      %1130 = vmatpush1.bf16.msra.mxu0 0
      %1131 = vmatprep.subr.bf16.mxu0 0
      %1132 = vmatpush1.bf16.msra.mxu0 0
      %1133 = vmatprep.subr.bf16.mxu0 0
      %1134 = vmatpush1.bf16.msra.mxu0 0
      %1135 = vmatprep.subr.bf16.mxu0 0
      %1136 = vmatpush1.bf16.msra.mxu0 0
      %1137 = vmatprep.subr.bf16.mxu0 0
      %1138 = vmatpush1.bf16.msra.mxu0 0
      %1139 = vmatprep.subr.bf16.mxu0 0
      %1140 = vmatpush1.bf16.msra.mxu0 0
      %1141 = vmatprep.subr.bf16.mxu0 0
      %1142 = vmatpush1.bf16.msra.mxu0 0
      %1143 = vmatprep.subr.bf16.mxu0 0
      %1144 = vmatpush1.bf16.msra.mxu0 0
      %1145 = vmatprep.subr.bf16.mxu0 0
      %1146 = vmatpush1.bf16.msra.mxu0 0
      %1147 = vmatprep.subr.bf16.mxu0 0
      %1148 = vmatpush1.bf16.msra.mxu0 0
      %1149 = vmatprep.subr.bf16.mxu0 0
      %1150 = vmatpush1.bf16.msra.mxu0 0
      %1151 = vmatprep.subr.bf16.mxu0 0
      %1152 = vmatpush1.bf16.msra.mxu0 0
      %1153 = vmatprep.subr.bf16.mxu0 0
      %1154 = vmatpush1.bf16.msra.mxu0 0
      %1155 = vmatprep.subr.bf16.mxu0 0
      %1156 = vmatpush1.bf16.msra.mxu0 0
      %1157 = vmatprep.mubr.bf16.mxu0 0
      %1158 = vmatmul.mubr.bf16.gmra.mrb[0].mxu0 %v1120
      %v1159 = vpop.f32.mrb[0].mxu0
      %v1160 = vadd.f32 0.0, %v1159
      %v1161 = vpop.f32.mrb[0].mxu0
      %v1162 = vpop.f32.mrb[0].mxu0
      %v1163 = vpop.f32.mrb[0].mxu0
      %1164 = vdwg.mxu0
      %v1166 = vsel %vm839, %v1066, 0
      %v1169 = vsel %vm1075, %v1070, 0
      %1171 = vmatprep.subr.bf16.mxu0 0
      %1172 = vmatpush1.bf16.msra.mxu0 %v1169
      %1173 = vmatprep.subr.bf16.mxu0 0
      %1174 = vmatpush1.bf16.msra.mxu0 0
      %1175 = vmatprep.subr.bf16.mxu0 0
      %1176 = vmatpush1.bf16.msra.mxu0 0
      %1177 = vmatprep.subr.bf16.mxu0 0
      %1178 = vmatpush1.bf16.msra.mxu0 0
      %1179 = vmatprep.subr.bf16.mxu0 0
      %1180 = vmatpush1.bf16.msra.mxu0 0
      %1181 = vmatprep.subr.bf16.mxu0 0
      %1182 = vmatpush1.bf16.msra.mxu0 0
      %1183 = vmatprep.subr.bf16.mxu0 0
      %1184 = vmatpush1.bf16.msra.mxu0 0
      %1185 = vmatprep.subr.bf16.mxu0 0
      %1186 = vmatpush1.bf16.msra.mxu0 0
      %1187 = vmatprep.subr.bf16.mxu0 0
      %1188 = vmatpush1.bf16.msra.mxu0 0
      %1189 = vmatprep.subr.bf16.mxu0 0
      %1190 = vmatpush1.bf16.msra.mxu0 0
      %1191 = vmatprep.subr.bf16.mxu0 0
      %1192 = vmatpush1.bf16.msra.mxu0 0
      %1193 = vmatprep.subr.bf16.mxu0 0
      %1194 = vmatpush1.bf16.msra.mxu0 0
      %1195 = vmatprep.subr.bf16.mxu0 0
      %1196 = vmatpush1.bf16.msra.mxu0 0
      %1197 = vmatprep.subr.bf16.mxu0 0
      %1198 = vmatpush1.bf16.msra.mxu0 0
      %1199 = vmatprep.subr.bf16.mxu0 0
      %1200 = vmatpush1.bf16.msra.mxu0 0
      %1201 = vmatprep.subr.bf16.mxu0 0
      %1202 = vmatpush1.bf16.msra.mxu0 0
      %1203 = vmatprep.mubr.bf16.mxu0 0
      %1204 = vmatmul.mubr.bf16.gmra.mrb[0].mxu0 %v1166
      %v1205 = vpop.f32.mrb[0].mxu0
      %v1206 = vadd.f32 0.0, %v1205
      %v1207 = vpop.f32.mrb[0].mxu0
      %v1208 = vpop.f32.mrb[0].mxu0
      %v1209 = vpop.f32.mrb[0].mxu0
      %1210 = vdwg.mxu0
      %v1212 = vsel %vm839, %v1067, 0
      %v1215 = vsel %vm1075, %v1071, 0
      %1217 = vmatprep.subr.bf16.mxu0 0
      %1218 = vmatpush1.bf16.msra.mxu0 %v1215
      %1219 = vmatprep.subr.bf16.mxu0 0
      %1220 = vmatpush1.bf16.msra.mxu0 0
      %1221 = vmatprep.subr.bf16.mxu0 0
      %1222 = vmatpush1.bf16.msra.mxu0 0
      %1223 = vmatprep.subr.bf16.mxu0 0
      %1224 = vmatpush1.bf16.msra.mxu0 0
      %1225 = vmatprep.subr.bf16.mxu0 0
      %1226 = vmatpush1.bf16.msra.mxu0 0
      %1227 = vmatprep.subr.bf16.mxu0 0
      %1228 = vmatpush1.bf16.msra.mxu0 0
      %1229 = vmatprep.subr.bf16.mxu0 0
      %1230 = vmatpush1.bf16.msra.mxu0 0
      %1231 = vmatprep.subr.bf16.mxu0 0
      %1232 = vmatpush1.bf16.msra.mxu0 0
      %1233 = vmatprep.subr.bf16.mxu0 0
      %1234 = vmatpush1.bf16.msra.mxu0 0
      %1235 = vmatprep.subr.bf16.mxu0 0
      %1236 = vmatpush1.bf16.msra.mxu0 0
      %1237 = vmatprep.subr.bf16.mxu0 0
      %1238 = vmatpush1.bf16.msra.mxu0 0
      %1239 = vmatprep.subr.bf16.mxu0 0
      %1240 = vmatpush1.bf16.msra.mxu0 0
      %1241 = vmatprep.subr.bf16.mxu0 0
      %1242 = vmatpush1.bf16.msra.mxu0 0
      %1243 = vmatprep.subr.bf16.mxu0 0
      %1244 = vmatpush1.bf16.msra.mxu0 0
      %1245 = vmatprep.subr.bf16.mxu0 0
      %1246 = vmatpush1.bf16.msra.mxu0 0
      %1247 = vmatprep.subr.bf16.mxu0 0
      %1248 = vmatpush1.bf16.msra.mxu0 0
      %1249 = vmatprep.mubr.bf16.mxu0 0
      %1250 = vmatmul.mubr.bf16.gmra.mrb[0].mxu0 %v1212
      %v1251 = vpop.f32.mrb[0].mxu0
      %v1252 = vadd.f32 0.0, %v1251
      %v1253 = vpop.f32.mrb[0].mxu0
      %v1254 = vpop.f32.mrb[0].mxu0
      %v1255 = vpop.f32.mrb[0].mxu0
      %1256 = vdwg.mxu0
      %v1257 = vrcp.pop %v1054
      %v1258 = vrcp.pop %v1057
      %v1259 = vrcp.pop %v1060
      %v1260 = vrcp.pop %v1063
      %v1261 = vmul.f32 %v1114, %v1257
      %v1262 = vmul.f32 %v1160, %v1258
      %v1263 = vmul.f32 %v1206, %v1259
      %v1264 = vmul.f32 %v1252, %v1260
      %1266 = vrot.lane.b32.xlu0 %v1262, 8
      %v1267 = vpop.permute.xlu0 %1266
      %1270 = vrot.lane.b32.xlu0 %v1263, 16
      %v1271 = vpop.permute.xlu0 %1270
      %1274 = vrot.lane.b32.xlu0 %v1264, 24
      %v1275 = vpop.permute.xlu0 %1274
      %v1277 = vsel %vm839, %v1261, %v1267
      %vm1278 = vcmask 130048
      %v1279 = vsel %vm1278, %v1277, %v1271
      %vm1280 = vcmask 195584
      %v1281 = vsel %vm1280, %v1279, %v1275
      %v1282 = vpack.c.bf16 %v1281, %v1281
      %v1283 = vld [vmem:[%s9] sm:$0xf]
      %v1284 = vld [vmem:[%s9 + $0x4] sm:$0xf]
      %v1285 = vld [vmem:[%s9 + $0x8] sm:$0xf]
      %v1286 = vld [vmem:[%s9 + $0xc] sm:$0xf]
      %v1287 = vld [vmem:[%s10] sm:$0x1]
      %v1289 = vlaneseq
      %v1290 = vshrl.u32 %v1289, 7
      %v1291 = vsub.s32 0, %v1290
      %v1292 = vrot.slane %v1287, %v1291
      %v1298 = vunpack.c.l.b16 %v1283
      %v1299 = vunpack.c.l.b16 %v1284
      %v1300 = vunpack.c.l.b16 %v1285
      %v1301 = vunpack.c.l.b16 %v1286
      %v1302 = vpack.c.b16 %v1299, %v1298
      %v1303 = vpack.c.b16 %v1301, %v1300
      %v1307 = vsel %vm559, %v1282, 0
      %1309 = vmatprep.subr.bf16.mxu0 0
      %1310 = vmatpush1.bf16.msra.mxu0 %v1302
      %1311 = vmatprep.subr.bf16.mxu0 0
      %1312 = vmatpush1.bf16.msra.mxu0 %v1303
      %1313 = vmatprep.subr.bf16.mxu0 0
      %1314 = vmatpush1.bf16.msra.mxu0 0
      %1315 = vmatprep.subr.bf16.mxu0 0
      %1316 = vmatpush1.bf16.msra.mxu0 0
      %1317 = vmatprep.subr.bf16.mxu0 0
      %1318 = vmatpush1.bf16.msra.mxu0 0
      %1319 = vmatprep.subr.bf16.mxu0 0
      %1320 = vmatpush1.bf16.msra.mxu0 0
      %1321 = vmatprep.subr.bf16.mxu0 0
      %1322 = vmatpush1.bf16.msra.mxu0 0
      %1323 = vmatprep.subr.bf16.mxu0 0
      %1324 = vmatpush1.bf16.msra.mxu0 0
      %1325 = vmatprep.subr.bf16.mxu0 0
      %1326 = vmatpush1.bf16.msra.mxu0 0
      %1327 = vmatprep.subr.bf16.mxu0 0
      %1328 = vmatpush1.bf16.msra.mxu0 0
      %1329 = vmatprep.subr.bf16.mxu0 0
      %1330 = vmatpush1.bf16.msra.mxu0 0
      %1331 = vmatprep.subr.bf16.mxu0 0
      %1332 = vmatpush1.bf16.msra.mxu0 0
      %1333 = vmatprep.subr.bf16.mxu0 0
      %1334 = vmatpush1.bf16.msra.mxu0 0
      %1335 = vmatprep.subr.bf16.mxu0 0
      %1336 = vmatpush1.bf16.msra.mxu0 0
      %1337 = vmatprep.subr.bf16.mxu0 0
      %1338 = vmatpush1.bf16.msra.mxu0 0
      %1339 = vmatprep.subr.bf16.mxu0 0
      %1340 = vmatpush1.bf16.msra.mxu0 0
      %1341 = vmatprep.mubr.bf16.mxu0 0
      %1342 = vmatmul.mubr.bf16.gmra.mrb[0].mxu0 %v1307
      %v1343 = vpop.f32.mrb[0].mxu0
      %v1344 = vadd.f32 %v1292, %v1343
      %v1345 = vpop.f32.mrb[0].mxu0
      %v1346 = vpop.f32.mrb[0].mxu0
      %v1347 = vpop.f32.mrb[0].mxu0
      %1348 = vdwg.mxu0
      %v1349 = vlaneseq
      %v1350 = vshrl.u32 %v1349, 7
      %v1351 = vsub.s32 2, %v1350
      %v1352 = vrot.slane %v558, %v1351
      %v1353 = vmul.f32 %v1352, %v1344
      %v1354 = vadd.f32 %v556, %v1353
      %v1355 = vsel %vm559, %v1354, 0.0
      %1356 = vadd.xlane.f32.xlu0 %v1355
      %v1357 = vpop.xlane.xlu0 %1356
      %v1358 = vmul.f32 %v1357, %v563
      %v1359 = vmul.f32 %v1354, %v1354
      %v1360 = vsel %vm559, %v1359, 0.0
      %1361 = vadd.xlane.f32.xlu0 %v1360
      %v1362 = vpop.xlane.xlu0 %1361
      %v1363 = vmul.f32 %v1362, %v563
      %v1364 = vmul.f32 %v1358, %v1358
      %v1365 = vsub.f32 %v1363, %v1364
      %v1366 = vsub.f32 %v1354, %v1358
      %v1367 = vadd.f32 %v1365, 1e-06
      %v1368 = vrsqrt.pop %v1367
      %v1369 = vmul.f32 %v1366, %v1368
      %v1370 = vlaneseq
      %v1371 = vshrl.u32 %v1370, 7
      %v1372 = vsub.s32 4, %v1371
      %v1373 = vrot.slane %v576, %v1372
      %v1374 = vmul.f32 %v1369, %v1373
      %v1375 = vlaneseq
      %v1376 = vshrl.u32 %v1375, 7
      %v1377 = vsub.s32 3, %v1376
      %v1378 = vrot.slane %v558, %v1377
      %v1379 = vadd.f32 %v1374, %v1378
      %v1380 = vpack.c.bf16 %v1379, %v1379
      %v1381 = vld [vmem:[%s11] sm:$0xf]
      %v1382 = vld [vmem:[%s11 + $0x4] sm:$0xf]
      %v1383 = vld [vmem:[%s11 + $0x8] sm:$0xf]
      %v1384 = vld [vmem:[%s11 + $0xc] sm:$0xf]
      %v1385 = vld [vmem:[%s12] sm:$0x1]
      %v1387 = vlaneseq
      %v1388 = vshrl.u32 %v1387, 7
      %v1389 = vsub.s32 0, %v1388
      %v1390 = vrot.slane %v1385, %v1389
      %v1396 = vunpack.c.l.b16 %v1381
      %v1397 = vunpack.c.l.b16 %v1382
      %v1398 = vunpack.c.l.b16 %v1383
      %v1399 = vunpack.c.l.b16 %v1384
      %v1400 = vpack.c.b16 %v1397, %v1396
      %v1401 = vpack.c.b16 %v1399, %v1398
      %v1405 = vsel %vm559, %v1380, 0
      %1407 = vmatprep.subr.bf16.mxu0 0
      %1408 = vmatpush1.bf16.msra.mxu0 %v1400
      %1409 = vmatprep.subr.bf16.mxu0 0
      %1410 = vmatpush1.bf16.msra.mxu0 %v1401
      %1411 = vmatprep.subr.bf16.mxu0 0
      %1412 = vmatpush1.bf16.msra.mxu0 0
      %1413 = vmatprep.subr.bf16.mxu0 0
      %1414 = vmatpush1.bf16.msra.mxu0 0
      %1415 = vmatprep.subr.bf16.mxu0 0
      %1416 = vmatpush1.bf16.msra.mxu0 0
      %1417 = vmatprep.subr.bf16.mxu0 0
      %1418 = vmatpush1.bf16.msra.mxu0 0
      %1419 = vmatprep.subr.bf16.mxu0 0
      %1420 = vmatpush1.bf16.msra.mxu0 0
      %1421 = vmatprep.subr.bf16.mxu0 0
      %1422 = vmatpush1.bf16.msra.mxu0 0
      %1423 = vmatprep.subr.bf16.mxu0 0
      %1424 = vmatpush1.bf16.msra.mxu0 0
      %1425 = vmatprep.subr.bf16.mxu0 0
      %1426 = vmatpush1.bf16.msra.mxu0 0
      %1427 = vmatprep.subr.bf16.mxu0 0
      %1428 = vmatpush1.bf16.msra.mxu0 0
      %1429 = vmatprep.subr.bf16.mxu0 0
      %1430 = vmatpush1.bf16.msra.mxu0 0
      %1431 = vmatprep.subr.bf16.mxu0 0
      %1432 = vmatpush1.bf16.msra.mxu0 0
      %1433 = vmatprep.subr.bf16.mxu0 0
      %1434 = vmatpush1.bf16.msra.mxu0 0
      %1435 = vmatprep.subr.bf16.mxu0 0
      %1436 = vmatpush1.bf16.msra.mxu0 0
      %1437 = vmatprep.subr.bf16.mxu0 0
      %1438 = vmatpush1.bf16.msra.mxu0 0
      %1439 = vmatprep.mubr.bf16.mxu0 0
      %1440 = vmatmul.mubr.bf16.gmra.mrb[0].mxu0 %v1405
      %v1441 = vpop.f32.mrb[0].mxu0
      %v1442 = vadd.f32 %v1390, %v1441
      %v1443 = vpop.f32.mrb[0].mxu0
      %v1444 = vpop.f32.mrb[0].mxu0
      %v1445 = vpop.f32.mrb[0].mxu0
      %1446 = vdwg.mxu0
      %v1447 = vmul.f32 %v1442, 0.5
      %v1448 = vmul.f32 %v1442, 0.044715
      %v1449 = vmul.f32 %v1448, %v1442
      %v1450 = vmul.f32 %v1449, %v1442
      %v1451 = vadd.f32 %v1442, %v1450
      %v1452 = vmul.f32 %v1451, 0.7978846
      %v1453 = vtanh.pop %v1452
      %v1454 = vadd.f32 %v1453, 1.0
      %v1455 = vmul.f32 %v1447, %v1454
      %v1456 = vpack.c.bf16 %v1455, %v1455
      %v1457 = vld [vmem:[%s13] sm:$0xf]
      %v1458 = vld [vmem:[%s13 + $0x4] sm:$0xf]
      %v1459 = vld [vmem:[%s13 + $0x8] sm:$0xf]
      %v1460 = vld [vmem:[%s13 + $0xc] sm:$0xf]
      %v1461 = vld [vmem:[%s13 + $0x10] sm:$0xf]
      %v1462 = vld [vmem:[%s13 + $0x14] sm:$0xf]
      %v1463 = vld [vmem:[%s13 + $0x18] sm:$0xf]
      %v1464 = vld [vmem:[%s13 + $0x1c] sm:$0xf]
      %v1465 = vld [vmem:[%s13 + $0x20] sm:$0xf]
      %v1466 = vld [vmem:[%s13 + $0x24] sm:$0xf]
      %v1467 = vld [vmem:[%s13 + $0x28] sm:$0xf]
      %v1468 = vld [vmem:[%s13 + $0x2c] sm:$0xf]
      %v1469 = vld [vmem:[%s13 + $0x30] sm:$0xf]
      %v1470 = vld [vmem:[%s13 + $0x34] sm:$0xf]
      %v1471 = vld [vmem:[%s13 + $0x38] sm:$0xf]
      %v1472 = vld [vmem:[%s13 + $0x3c] sm:$0xf]
      %v1473 = vld [vmem:[%s14] sm:$0x1]
      %v1475 = vlaneseq
      %v1476 = vshrl.u32 %v1475, 7
      %v1477 = vsub.s32 0, %v1476
      %v1478 = vrot.slane %v1473, %v1477
      %v1496 = vunpack.c.l.b16 %v1457
      %v1497 = vunpack.c.l.b16 %v1458
      %v1498 = vunpack.c.l.b16 %v1459
      %v1499 = vunpack.c.l.b16 %v1460
      %v1500 = vunpack.c.l.b16 %v1461
      %v1501 = vunpack.c.l.b16 %v1462
      %v1502 = vunpack.c.l.b16 %v1463
      %v1503 = vunpack.c.l.b16 %v1464
      %v1504 = vunpack.c.l.b16 %v1465
      %v1505 = vunpack.c.l.b16 %v1466
      %v1506 = vunpack.c.l.b16 %v1467
      %v1507 = vunpack.c.l.b16 %v1468
      %v1508 = vunpack.c.l.b16 %v1469
      %v1509 = vunpack.c.l.b16 %v1470
      %v1510 = vunpack.c.l.b16 %v1471
      %v1511 = vunpack.c.l.b16 %v1472
      %v1512 = vpack.c.b16 %v1497, %v1496
      %v1513 = vpack.c.b16 %v1499, %v1498
      %v1514 = vpack.c.b16 %v1501, %v1500
      %v1515 = vpack.c.b16 %v1503, %v1502
      %v1516 = vpack.c.b16 %v1505, %v1504
      %v1517 = vpack.c.b16 %v1507, %v1506
      %v1518 = vpack.c.b16 %v1509, %v1508
      %v1519 = vpack.c.b16 %v1511, %v1510
      %1528 = vmatprep.subr.bf16.mxu0 0
      %1529 = vmatpush1.bf16.msra.mxu0 %v1512
      %1530 = vmatprep.subr.bf16.mxu0 0
      %1531 = vmatpush1.bf16.msra.mxu0 %v1513
      %1532 = vmatprep.subr.bf16.mxu0 0
      %1533 = vmatpush1.bf16.msra.mxu0 %v1514
      %1534 = vmatprep.subr.bf16.mxu0 0
      %1535 = vmatpush1.bf16.msra.mxu0 %v1515
      %1536 = vmatprep.subr.bf16.mxu0 0
      %1537 = vmatpush1.bf16.msra.mxu0 %v1516
      %1538 = vmatprep.subr.bf16.mxu0 0
      %1539 = vmatpush1.bf16.msra.mxu0 %v1517
      %1540 = vmatprep.subr.bf16.mxu0 0
      %1541 = vmatpush1.bf16.msra.mxu0 %v1518
      %1542 = vmatprep.subr.bf16.mxu0 0
      %1543 = vmatpush1.bf16.msra.mxu0 %v1519
      %1544 = vmatprep.subr.bf16.mxu0 0
      %1545 = vmatpush1.bf16.msra.mxu0 0
      %1546 = vmatprep.subr.bf16.mxu0 0
      %1547 = vmatpush1.bf16.msra.mxu0 0
      %1548 = vmatprep.subr.bf16.mxu0 0
      %1549 = vmatpush1.bf16.msra.mxu0 0
      %1550 = vmatprep.subr.bf16.mxu0 0
      %1551 = vmatpush1.bf16.msra.mxu0 0
      %1552 = vmatprep.subr.bf16.mxu0 0
      %1553 = vmatpush1.bf16.msra.mxu0 0
      %1554 = vmatprep.subr.bf16.mxu0 0
      %1555 = vmatpush1.bf16.msra.mxu0 0
      %1556 = vmatprep.subr.bf16.mxu0 0
      %1557 = vmatpush1.bf16.msra.mxu0 0
      %1558 = vmatprep.subr.bf16.mxu0 0
      %1559 = vmatpush1.bf16.msra.mxu0 0
      %1560 = vmatprep.mubr.bf16.mxu0 0
      %1561 = vmatmul.mubr.bf16.gmra.mrb[0].mxu0 %v1456
      %v1562 = vpop.f32.mrb[0].mxu0
      %v1563 = vadd.f32 %v1478, %v1562
      %v1564 = vpop.f32.mrb[0].mxu0
      %v1565 = vpop.f32.mrb[0].mxu0
      %v1566 = vpop.f32.mrb[0].mxu0
      %1567 = vdwg.mxu0
      %v1568 = vlaneseq
      %v1569 = vshrl.u32 %v1568, 7
      %v1570 = vsub.s32 5, %v1569
      %v1571 = vrot.slane %v558, %v1570
      %v1572 = vmul.f32 %v1571, %v1563
      %v1573 = vadd.f32 %v1354, %v1572
      %1574 = vst.msk [vmem:[%s554] sm:$0xff] %vm559, %v1573
      %p1575 = scmp.lt.s32.totalorder %s30, 1
      %s1576 = scalar_select %p1575, %s30, 1
      %p1577 = scmp.lt.s32.totalorder %s31, 0
      %s1578 = scalar_select %p1577, %s31, 0
      %s1579 = sadd.s32 %s1578, %s1576
      %s1580 = smul.addr %s1579, 8
      %s1581 = scalar_lea.vmem %s15, %s1580
      // Predicated region
      $region81: #{dit_ode_block_forward.1} parent=79 // pred_check
        %p1582 = pneg %p390
      $region82: #{dit_ode_block_forward.1} parent=79 // pred_check_branch
        %1584 = sbr.rel (%p1582) target = $region84
      $region83: #{dit_ode_block_forward.1} parent=79 // pred_region
        _
      $region84: #{dit_ode_block_forward.1} parent=79 // pred_fallthru
        _
    $region80: #{dit_ode_block_forward.1} parent=5 // pred_fallthru
      _
    %p1585 = scmp.le.s32.totalorder 2, %s21
    // Predicated region
    $region85: #{dit_ode_block_forward.1} parent=5 // pred_check
      %p1586 = pneg %p1585
    $region86: #{dit_ode_block_forward.1} parent=5 // pred_check_branch
      %1588 = sbr.rel (%p1586) target = $region88
    $region87: #{dit_ode_block_forward.1} parent=5 // pred_region
      %s1589 = ssub.s32 %s21, 2
      // Predicated region
      $region89: #{dit_ode_block_forward.1} parent=87 // pred_check
        %p1590 = pneg %p396
      $region90: #{dit_ode_block_forward.1} parent=87 // pred_check_branch
        %1592 = sbr.rel (%p1590) target = $region92
      $region91: #{dit_ode_block_forward.1} parent=87 // pred_region
        %p1593 = scmp.lt.s32.totalorder %s32, 1
        %s1594 = scalar_select %p1593, %s32, 1
        %p1595 = scmp.lt.s32.totalorder %s33, 0
        %s1596 = scalar_select %p1595, %s33, 0
        %s1597 = sadd.s32 %s1596, %s1594
        %s1598 = smul.addr %s1597, 8
        %s1599 = scalar_lea.vmem %s15, %s1598
      $region92: #{dit_ode_block_forward.1} parent=87 // pred_fallthru
        _
    $region88: #{dit_ode_block_forward.1} parent=5 // pred_fallthru
      _
  $region6: #{dit_ode_block_forward.1} parent=0 // loop_footer
    %s25 = sadd.s32 1, %s21
  $region7: #{dit_ode_block_forward.1} parent=0 // loop_footer_branch
    %20 = sbr.rel target = $region3
  $region8: #{dit_ode_block_forward.1} parent=0 // loop_exit
    _

</llo_original>
